<compile_context>
chip_gen: v6e
topology: v6e:2x2x1
jax: 0.10.0
libtpu: 0.0.40
codegen_flags: <defaults>
</compile_context>

<pallas_src>
import functools

import jax
import jax.numpy as jnp
import numpy as np
from jax import lax
from jax.experimental import pallas as pl
from jax.experimental.pallas import tpu as pltpu

NEG = -1e30          # finite "-inf" for padded tag lanes (avoids 0 * inf = NaN)
LOG_FLOOR = 1e-30    # floor before log() in the forward recursion (insurance against log(0))


def _crf_head_kernel(maxlen_ref,                       # SMEM scalar prefetch: per-block max seq len
                     hid_ref, w_ref, b_ref,            # classifier head inputs
                     lab_ref, mtile_ref, mfull_ref,    # gold labels + mask (seq-tiled & full views)
                     start_ref, end_ref, trans_ref,    # CRF params, tag dim padded to T_pad
                     out_ref,                          # (1,1,1) per-block sum of log-likelihood
                     e_scr,                            # VMEM scratch: emissions for the batch block
                     *, BB, S, TS, H, T_pad):
    i = pl.program_id(0)                 # batch-block index
    j = pl.program_id(1)                 # sequence-tile index
    nseq = pl.num_programs(1)

    # ---- classifier head on this (batch block, seq tile): (BB*TS, H) @ (H, T_pad) on the MXU ----
    hid = hid_ref[...].reshape(BB * TS, H)
    logits = jnp.dot(hid, w_ref[...], preferred_element_type=jnp.float32) + b_ref[...]
    emis = logits.reshape(BB, TS, T_pad)
    # Smuggle the per-timestep mask gate into the last *padded* tag lane so the recursion can read
    # emissions + gate with one dynamic sublane slice (T < T_pad - 1 by construction; that lane is
    # excluded from num/den by the NEG padding of start/end/trans).
    lane = lax.broadcasted_iota(jnp.int32, (BB, TS, T_pad), 2)
    emis = jnp.where(lane == T_pad - 1, mtile_ref[...], emis)
    row0 = pl.multiple_of(j * TS, TS)
    e_scr[:, pl.ds(row0, TS), :] = emis

    # ---- once the block's emissions are complete, run the CRF (numerator + partition) ----
    @pl.when(j == nseq - 1)
    def _():
        e3 = e_scr[...]                                   # (BB, S, T_pad) f32
        labels = lab_ref[...]                             # (BB, S) i32
        mask = mfull_ref[...]                             # (BB, S) f32
        start = start_ref[...]                            # (1, T_pad)
        end = end_ref[...]                                # (1, T_pad)
        trans = trans_ref[...]                            # (T_pad, T_pad), padded entries = NEG

        # ----- gold-path score (numerator), fully hoisted out of the time recursion -----
        tag_iota = lax.broadcasted_iota(jnp.int32, (BB, S, T_pad), 2)
        oh3 = (tag_iota == labels[:, :, None]).astype(jnp.float32)        # (BB, S, T_pad)
        e_gold = jnp.sum(e3 * oh3, axis=2)                                # (BB, S)
        num_b = jnp.sum(mask * e_gold, axis=1, keepdims=True)             # mask[:,0]==1 assumed (torchcrf)
        num_b = num_b + jnp.sum(oh3[:, 0, :] * start, axis=1, keepdims=True)
        # gold transitions: one batched (BB*S,T_pad)@(T_pad,T_pad) matmul instead of S-1 tiny ones
        oh2 = oh3.reshape(BB * S, T_pad)
        rowsel = jnp.dot(oh2, trans, preferred_element_type=jnp.float32).reshape(BB, S, T_pad)
        t_gold = jnp.sum(rowsel[:, :-1, :] * oh3[:, 1:, :], axis=2)       # (BB, S-1)
        num_b = num_b + jnp.sum(mask[:, 1:] * t_gold, axis=1, keepdims=True)
        # end transition at each sequence's last valid position
        seq_end = jnp.sum(mask, axis=1, keepdims=True).astype(jnp.int32) - 1
        pos = lax.broadcasted_iota(jnp.int32, (BB, S), 1)
        sel_last = (pos == seq_end).astype(jnp.float32)                   # (BB, S)
        last_oh = jnp.sum(sel_last[:, :, None] * oh3, axis=1)             # (BB, T_pad)
        num_b = num_b + jnp.sum(last_oh * end, axis=1, keepdims=True)

        # ----- partition function: forward algorithm, logsumexp over prev tag on the MXU -----
        cmax = jnp.max(trans, axis=0, keepdims=True)                      # (1, T_pad) column-max shift
        exp_trans = jnp.exp(trans - cmax)                                 # padded rows -> exactly 0
        alpha0 = start + e3[:, 0, :]                                      # (BB, T_pad)
        n_steps = maxlen_ref[i]                                           # skip all-padding tail steps

        def step(t, alpha):
            slab = e_scr[:, pl.ds(t, 1), :].reshape(BB, T_pad)            # emissions_t (+ gate lane)
            gate = slab[:, T_pad - 1:]                                    # (BB, 1) == mask[:, t]
            amax = jnp.max(alpha, axis=1, keepdims=True)
            p = jnp.exp(alpha - amax)
            s = jnp.dot(p, exp_trans, preferred_element_type=jnp.float32) # (BB, T_pad)
            nxt = amax + cmax + jnp.log(jnp.maximum(s, LOG_FLOOR)) + slab
            return jnp.where(gate > 0.0, nxt, alpha)

        alpha = lax.fori_loop(1, n_steps, step, alpha0)

        alpha_end = alpha + end
        amax = jnp.max(alpha_end, axis=1, keepdims=True)
        den_b = amax + jnp.log(jnp.sum(jnp.exp(alpha_end - amax), axis=1, keepdims=True))  # (BB, 1)

        out_ref[...] = jnp.sum(num_b - den_b, axis=0, keepdims=True).reshape(1, 1, 1)


def sequence_label_loss(hidden, w, b, labels, mask, start, end, trans,
                        *, batch_block=None, seq_tile=None):
    """hidden: (B,S,H). Returns -crf(log_softmax(hidden @ w + b), labels, mask, reduction='mean')."""
    B, S, H = hidden.shape
    T = w.shape[1]
    # Lane-dense tag dim: pad to a multiple of 128, keeping >= 1 padded lane for the mask gate.
    T_pad = ((T + 1) + 127) // 128 * 128

    cdt = hidden.dtype     # head matmul runs in the encoder dtype (feed bf16 on v6e/v7x)
    w_pad = jnp.zeros((H, T_pad), cdt).at[:, :T].set(w.astype(cdt))
    b_pad = jnp.zeros((1, T_pad), jnp.float32).at[:, :T].set(b.astype(jnp.float32))
    start_pad = jnp.full((1, T_pad), NEG, jnp.float32).at[:, :T].set(start.astype(jnp.float32))
    end_pad = jnp.full((1, T_pad), NEG, jnp.float32).at[:, :T].set(end.astype(jnp.float32))
    trans_pad = jnp.full((T_pad, T_pad), NEG, jnp.float32).at[:T, :T].set(trans.astype(jnp.float32))

    BB = batch_block if batch_block is not None else (8 if B % 8 == 0 else B)
    assert B % BB == 0 and (BB % 8 == 0 or BB == B), "batch block must be 8-aligned or the full batch"
    nblk = B // BB
    TS = seq_tile if seq_tile is not None else (128 if S % 128 == 0 else S)
    assert S % TS == 0 and (TS % 8 == 0 or TS == S), "seq tile must be 8-aligned or the full sequence"
    nseq = S // TS

    labels = labels.astype(jnp.int32)
    mask_f = mask.astype(jnp.float32)
    mask3 = mask_f.reshape(B, S, 1)
    seq_lens = jnp.sum(mask_f, axis=1).astype(jnp.int32)
    blk_maxlen = jnp.max(seq_lens.reshape(nblk, BB), axis=1)   # scalar-prefetched recursion bounds

    kernel = functools.partial(_crf_head_kernel, BB=BB, S=S, TS=TS, H=H, T_pad=T_pad)

    grid_spec = pltpu.PrefetchScalarGridSpec(
        num_scalar_prefetch=1,
        grid=(nblk, nseq),
        in_specs=[
            pl.BlockSpec((BB, TS, H), lambda i, j, ml: (i, j, 0)),      # hidden (pipelined tiles)
            pl.BlockSpec((H, T_pad), lambda i, j, ml: (0, 0)),          # classifier weight (resident)
            pl.BlockSpec((1, T_pad), lambda i, j, ml: (0, 0)),          # classifier bias
            pl.BlockSpec((BB, S), lambda i, j, ml: (i, 0)),             # labels (full seq per block)
            pl.BlockSpec((BB, TS, 1), lambda i, j, ml: (i, j, 0)),      # mask, seq-tiled view
            pl.BlockSpec((BB, S), lambda i, j, ml: (i, 0)),             # mask, full-seq view
            pl.BlockSpec((1, T_pad), lambda i, j, ml: (0, 0)),          # CRF start_transitions
            pl.BlockSpec((1, T_pad), lambda i, j, ml: (0, 0)),          # CRF end_transitions
            pl.BlockSpec((T_pad, T_pad), lambda i, j, ml: (0, 0)),      # CRF transitions
        ],
        out_specs=pl.BlockSpec((1, 1, 1), lambda i, j, ml: (i, 0, 0)),
        scratch_shapes=[pltpu.VMEM((BB, S, T_pad), jnp.float32)],
    )

    cost = pl.CostEstimate(
        flops=int(2 * B * S * H * T_pad + 4 * B * S * T_pad * T_pad),
        transcendentals=int(3 * B * S * T_pad),
        bytes_accessed=int(B * S * H * jnp.dtype(hidden.dtype).itemsize
                           + (H + T_pad + 3) * T_pad * 4 + 3 * B * S * 4 + nblk * 4),
    )

    partial = pl.pallas_call(
        kernel,
        out_shape=jax.ShapeDtypeStruct((nblk, 1, 1), jnp.float32),
        grid_spec=grid_spec,
        compiler_params=pltpu.CompilerParams(
            dimension_semantics=("parallel", "arbitrary"),   # batch blocks shard across TCs (v7x)
            vmem_limit_bytes=48 * 1024 * 1024,
        ),
        cost_estimate=cost,
    )(blk_maxlen, hidden, w_pad, b_pad, labels, mask3, mask_f,
      start_pad, end_pad, trans_pad)

    return -jnp.sum(partial) / B     # torchcrf reduction='mean' (mean over batch elements)


def reference_loss(hidden, w, b, labels, mask, start, end, trans):
    """Pure-JAX mirror of torchcrf's forward() with log_softmax emissions, reduction='mean'."""
    logits = jnp.einsum('bsh,ht->bst', hidden.astype(jnp.float32), w) + b
    logp = jax.nn.log_softmax(logits, axis=2)
    B, S, T = logp.shape
    batch_idx = jnp.arange(B)
    num = start[labels[:, 0]] + logp[batch_idx, 0, labels[:, 0]]
    alpha = start[None, :] + logp[:, 0, :]
    for i in range(1, S):
        num = num + mask[:, i] * (trans[labels[:, i - 1], labels[:, i]]
                                  + logp[batch_idx, i, labels[:, i]])
        nxt = jax.scipy.special.logsumexp(
            alpha[:, :, None] + trans[None, :, :] + logp[:, i, :][:, None, :], axis=1)
        alpha = jnp.where(mask[:, i:i + 1] > 0, nxt, alpha)
    seq_ends = mask.sum(axis=1).astype(jnp.int32) - 1
    last_tags = labels[batch_idx, seq_ends]
    num = num + end[last_tags]
    den = jax.scipy.special.logsumexp(alpha + end[None, :], axis=1)
    return -jnp.mean(num - den)


if __name__ == "__main__":
    B, S, H, T, V = 16, 16, 32, 6, 50   # batch, seq, hidden, num_labels, vocab (small demo shapes)

    key = jax.random.PRNGKey(0)
    ks = jax.random.split(key, 9)
    emb_table = jax.random.normal(ks[0], (V, H), jnp.float32) * 0.1
    w = jax.random.normal(ks[1], (H, T), jnp.float32) * 0.1           # classifier head weight
    b = jax.random.normal(ks[2], (T,), jnp.float32) * 0.1             # classifier head bias
    start = jax.random.uniform(ks[3], (T,), jnp.float32, -0.1, 0.1)   # CRF start_transitions
    end = jax.random.uniform(ks[4], (T,), jnp.float32, -0.1, 0.1)     # CRF end_transitions
    trans = jax.random.uniform(ks[5], (T, T), jnp.float32, -0.1, 0.1)  # CRF transitions

    input_ids = jax.random.randint(ks[6], (B, S), 0, V, dtype=jnp.int32)
    labels = jax.random.randint(ks[7], (B, S), 0, T, dtype=jnp.int32)
    lengths = jax.random.randint(ks[8], (B,), 1, S + 1, dtype=jnp.int32)   # >=1 so mask[:,0]==1
    attention_mask = (jnp.arange(S)[None, :] < lengths[:, None]).astype(jnp.float32)

    # TODO(synk): BERT encoder stub — deterministic embedding lookup instead of transformer stack.
    hidden = emb_table[input_ids]

    loss = sequence_label_loss(hidden, w, b, labels, attention_mask, start, end, trans,
                               batch_block=8, seq_tile=8)
    jax.block_until_ready(loss)

    ref = reference_loss(hidden, w, b, labels, attention_mask, start, end, trans)
    np.testing.assert_allclose(np.asarray(loss), np.asarray(ref), rtol=1e-4, atol=1e-4)

    print("KERNEL_OK")
</pallas_src>

<mosaic_0001>
module attributes {stable_mosaic.version = 11 : i64} {
  func.func @_crf_head_kernel(%arg0: i32, %arg1: i32, %arg2: memref<2xi32, #tpu.memory_space<smem>>, %arg3: memref<8x8x32xf32, #tpu.memory_space<vmem>>, %arg4: memref<32x128xf32, #tpu.memory_space<vmem>>, %arg5: memref<1x128xf32, #tpu.memory_space<vmem>>, %arg6: memref<8x16xi32, #tpu.memory_space<vmem>>, %arg7: memref<8x8x1xf32, #tpu.memory_space<vmem>>, %arg8: memref<8x16xf32, #tpu.memory_space<vmem>>, %arg9: memref<1x128xf32, #tpu.memory_space<vmem>>, %arg10: memref<1x128xf32, #tpu.memory_space<vmem>>, %arg11: memref<128x128xf32, #tpu.memory_space<vmem>>, %arg12: memref<1x1x1xf32, #tpu.memory_space<vmem>>, %arg13: memref<8x16x128xf32, #tpu.memory_space<vmem>>) attributes {dimension_semantics = [#tpu.dimension_semantics<parallel>, #tpu.dimension_semantics<arbitrary>], iteration_bounds = array<i64: 2, 2>, scalar_prefetch = 1 : i64, scratch_operands = 1 : i64, tpu.core_type = #tpu.core_type<tc>, window_params = [{transform_indices = @transform_0, window_bounds = array<i64: 8, 8, 32>}, {pipeline_mode = #tpu.pipeline_mode<synchronous>, transform_indices = @transform_1, window_bounds = array<i64: 32, 128>}, {pipeline_mode = #tpu.pipeline_mode<synchronous>, transform_indices = @transform_2, window_bounds = array<i64: 1, 128>}, {transform_indices = @transform_3, window_bounds = array<i64: 8, 16>}, {transform_indices = @transform_4, window_bounds = array<i64: 8, 8, 1>}, {transform_indices = @transform_5, window_bounds = array<i64: 8, 16>}, {pipeline_mode = #tpu.pipeline_mode<synchronous>, transform_indices = @transform_6, window_bounds = array<i64: 1, 128>}, {pipeline_mode = #tpu.pipeline_mode<synchronous>, transform_indices = @transform_7, window_bounds = array<i64: 1, 128>}, {pipeline_mode = #tpu.pipeline_mode<synchronous>, transform_indices = @transform_8, window_bounds = array<i64: 128, 128>}, {transform_indices = @transform_9, window_bounds = array<i64: 1, 1, 1>}]} {
    %c0 = arith.constant 0 : index
    %c0_0 = arith.constant 0 : index
    %c0_1 = arith.constant 0 : index
    %0 = vector.load %arg3[%c0, %c0_0, %c0_1] : memref<8x8x32xf32, #tpu.memory_space<vmem>>, vector<8x8x32xf32>
    %1 = vector.shape_cast %0 : vector<8x8x32xf32> to vector<64x32xf32>
    %c0_2 = arith.constant 0 : index
    %c0_3 = arith.constant 0 : index
    %2 = vector.load %arg4[%c0_2, %c0_3] : memref<32x128xf32, #tpu.memory_space<vmem>>, vector<32x128xf32>
    %cst = arith.constant dense<0.000000e+00> : vector<64x128xf32>
    %3 = tpu.matmul %1, %2, %cst {dimension_numbers = #tpu.dot_dimension_numbers<[1], [0], [0], [1], [0, 0, 1, 1], [], []>} : vector<64x32xf32>, vector<32x128xf32>, vector<64x128xf32> -> vector<64x128xf32>
    %c0_4 = arith.constant 0 : index
    %c0_5 = arith.constant 0 : index
    %4 = vector.load %arg5[%c0_4, %c0_5] : memref<1x128xf32, #tpu.memory_space<vmem>>, vector<1x128xf32>
    %5 = vector.broadcast %4 : vector<1x128xf32> to vector<64x128xf32>
    %6 = arith.addf %3, %5 : vector<64x128xf32>
    %7 = vector.shape_cast %6 : vector<64x128xf32> to vector<8x8x128xf32>
    %8 = tpu.iota {dimensions = array<i32: 2>} : vector<8x8x128xi32>
    %c127_i32 = arith.constant 127 : i32
    %9 = vector.broadcast %c127_i32 : i32 to vector<8x8x128xi32>
    %10 = arith.cmpi eq, %8, %9 : vector<8x8x128xi32>
    %c0_6 = arith.constant 0 : index
    %c0_7 = arith.constant 0 : index
    %c0_8 = arith.constant 0 : index
    %11 = vector.load %arg7[%c0_6, %c0_7, %c0_8] : memref<8x8x1xf32, #tpu.memory_space<vmem>>, vector<8x8x1xf32>
    %12 = vector.shape_cast %11 : vector<8x8x1xf32> to vector<8x8x1xf32>
    %13 = vector.broadcast %12 : vector<8x8x1xf32> to vector<8x8x128xf32>
    %14 = arith.select %10, %13, %7 : vector<8x8x128xi1>, vector<8x8x128xf32>
    %c8_i32 = arith.constant 8 : i32
    %15 = arith.muli %arg1, %c8_i32 : i32
    %16 = tpu.assume_multiple %15, 8 : i32
    %c0_9 = arith.constant 0 : index
    %17 = arith.index_cast %16 : i32 to index
    %c0_10 = arith.constant 0 : index
    %18 = vector.load %arg13[%c0_9, %17, %c0_10] : memref<8x16x128xf32, #tpu.memory_space<vmem>>, vector<8x8x128xf32>
    tpu.vector_store %arg13[%c0_9, %17, %c0_10], %14 {strides = array<i32>} : memref<8x16x128xf32, #tpu.memory_space<vmem>>, vector<8x8x128xf32>,
    %c1_i32 = arith.constant 1 : i32
    %19 = arith.cmpi eq, %arg1, %c1_i32 : i32
    %20 = arith.extui %19 : i1 to i32
    %c0_i32 = arith.constant 0 : i32
    %21 = arith.cmpi ne, %20, %c0_i32 : i32
    scf.if %21 {
      %c0_11 = arith.constant 0 : index
      %c0_12 = arith.constant 0 : index
      %c0_13 = arith.constant 0 : index
      %22 = vector.load %arg13[%c0_11, %c0_12, %c0_13] : memref<8x16x128xf32, #tpu.memory_space<vmem>>, vector<8x16x128xf32>
      %c0_14 = arith.constant 0 : index
      %c0_15 = arith.constant 0 : index
      %23 = vector.load %arg6[%c0_14, %c0_15] : memref<8x16xi32, #tpu.memory_space<vmem>>, vector<8x16xi32>
      %c0_16 = arith.constant 0 : index
      %c0_17 = arith.constant 0 : index
      %24 = vector.load %arg8[%c0_16, %c0_17] : memref<8x16xf32, #tpu.memory_space<vmem>>, vector<8x16xf32>
      %c0_18 = arith.constant 0 : index
      %c0_19 = arith.constant 0 : index
      %25 = vector.load %arg9[%c0_18, %c0_19] : memref<1x128xf32, #tpu.memory_space<vmem>>, vector<1x128xf32>
      %c0_20 = arith.constant 0 : index
      %c0_21 = arith.constant 0 : index
      %26 = vector.load %arg10[%c0_20, %c0_21] : memref<1x128xf32, #tpu.memory_space<vmem>>, vector<1x128xf32>
      %c0_22 = arith.constant 0 : index
      %c0_23 = arith.constant 0 : index
      %27 = vector.load %arg11[%c0_22, %c0_23] : memref<128x128xf32, #tpu.memory_space<vmem>>, vector<128x128xf32>
      %28 = tpu.iota {dimensions = array<i32: 2>} : vector<8x16x128xi32>
      %29 = vector.shape_cast %23 : vector<8x16xi32> to vector<8x16x1xi32>
      %30 = vector.broadcast %29 : vector<8x16x1xi32> to vector<8x16x128xi32>
      %31 = arith.cmpi eq, %28, %30 : vector<8x16x128xi32>
      %32 = arith.extui %31 : vector<8x16x128xi1> to vector<8x16x128xi32>
      %33 = arith.sitofp %32 : vector<8x16x128xi32> to vector<8x16x128xf32>
      %34 = arith.mulf %22, %33 : vector<8x16x128xf32>
      %cst_24 = arith.constant dense<0.000000e+00> : vector<8x16xf32>
      %35 = vector.multi_reduction <add>, %34, %cst_24 [2] : vector<8x16x128xf32> to vector<8x16xf32>
      %36 = arith.mulf %24, %35 : vector<8x16xf32>
      %cst_25 = arith.constant dense<0.000000e+00> : vector<8xf32>
      %37 = vector.multi_reduction <add>, %36, %cst_25 [1] : vector<8x16xf32> to vector<8xf32>
      %38 = vector.shape_cast %37 : vector<8xf32> to vector<8x1xf32>
      %39 = vector.extract_strided_slice %33 {offsets = [0, 0, 0], sizes = [8, 1, 128], strides = [1, 1, 1]} : vector<8x16x128xf32> to vector<8x1x128xf32>
      %40 = vector.shape_cast %39 : vector<8x1x128xf32> to vector<8x128xf32>
      %41 = vector.broadcast %25 : vector<1x128xf32> to vector<8x128xf32>
      %42 = arith.mulf %40, %41 : vector<8x128xf32>
      %cst_26 = arith.constant dense<0.000000e+00> : vector<8xf32>
      %43 = vector.multi_reduction <add>, %42, %cst_26 [1] : vector<8x128xf32> to vector<8xf32>
      %44 = vector.shape_cast %43 : vector<8xf32> to vector<8x1xf32>
      %45 = arith.addf %38, %44 : vector<8x1xf32>
      %46 = vector.shape_cast %33 : vector<8x16x128xf32> to vector<128x128xf32>
      %cst_27 = arith.constant dense<0.000000e+00> : vector<128x128xf32>
      %47 = tpu.matmul %46, %27, %cst_27 {dimension_numbers = #tpu.dot_dimension_numbers<[1], [0], [0], [1], [0, 0, 1, 1], [], []>} : vector<128x128xf32>, vector<128x128xf32>, vector<128x128xf32> -> vector<128x128xf32>
      %48 = vector.shape_cast %47 : vector<128x128xf32> to vector<8x16x128xf32>
      %49 = vector.extract_strided_slice %48 {offsets = [0, 0, 0], sizes = [8, 15, 128], strides = [1, 1, 1]} : vector<8x16x128xf32> to vector<8x15x128xf32>
      %50 = vector.extract_strided_slice %33 {offsets = [0, 1, 0], sizes = [8, 15, 128], strides = [1, 1, 1]} : vector<8x16x128xf32> to vector<8x15x128xf32>
      %51 = arith.mulf %49, %50 : vector<8x15x128xf32>
      %cst_28 = arith.constant dense<0.000000e+00> : vector<8x15xf32>
      %52 = vector.multi_reduction <add>, %51, %cst_28 [2] : vector<8x15x128xf32> to vector<8x15xf32>
      %53 = vector.extract_strided_slice %24 {offsets = [0, 1], sizes = [8, 15], strides = [1, 1]} : vector<8x16xf32> to vector<8x15xf32>
      %54 = arith.mulf %53, %52 : vector<8x15xf32>
      %cst_29 = arith.constant dense<0.000000e+00> : vector<8xf32>
      %55 = vector.multi_reduction <add>, %54, %cst_29 [1] : vector<8x15xf32> to vector<8xf32>
      %56 = vector.shape_cast %55 : vector<8xf32> to vector<8x1xf32>
      %57 = arith.addf %45, %56 : vector<8x1xf32>
      %cst_30 = arith.constant dense<0.000000e+00> : vector<8xf32>
      %58 = vector.multi_reduction <add>, %24, %cst_30 [1] : vector<8x16xf32> to vector<8xf32>
      %59 = vector.shape_cast %58 : vector<8xf32> to vector<8x1xf32>
      %60 = arith.fptosi %59 : vector<8x1xf32> to vector<8x1xi32>
      %c1_i32_31 = arith.constant 1 : i32
      %61 = vector.broadcast %c1_i32_31 : i32 to vector<8x1xi32>
      %62 = arith.subi %60, %61 : vector<8x1xi32>
      %63 = tpu.iota {dimensions = array<i32: 1>} : vector<8x16xi32>
      %64 = vector.broadcast %62 : vector<8x1xi32> to vector<8x16xi32>
      %65 = arith.cmpi eq, %63, %64 : vector<8x16xi32>
      %66 = arith.extui %65 : vector<8x16xi1> to vector<8x16xi32>
      %67 = arith.sitofp %66 : vector<8x16xi32> to vector<8x16xf32>
      %68 = vector.shape_cast %67 : vector<8x16xf32> to vector<8x16x1xf32>
      %69 = vector.broadcast %68 : vector<8x16x1xf32> to vector<8x16x128xf32>
      %70 = arith.mulf %69, %33 : vector<8x16x128xf32>
      %cst_32 = arith.constant dense<0.000000e+00> : vector<8x128xf32>
      %71 = vector.multi_reduction <add>, %70, %cst_32 [1] : vector<8x16x128xf32> to vector<8x128xf32>
      %72 = vector.broadcast %26 : vector<1x128xf32> to vector<8x128xf32>
      %73 = arith.mulf %71, %72 : vector<8x128xf32>
      %cst_33 = arith.constant dense<0.000000e+00> : vector<8xf32>
      %74 = vector.multi_reduction <add>, %73, %cst_33 [1] : vector<8x128xf32> to vector<8xf32>
      %75 = vector.shape_cast %74 : vector<8xf32> to vector<8x1xf32>
      %76 = arith.addf %57, %75 : vector<8x1xf32>
      %cst_34 = arith.constant dense<0xFF800000> : vector<128xf32>
      %77 = vector.multi_reduction <maximumf>, %27, %cst_34 [0] : vector<128x128xf32> to vector<128xf32>
      %78 = vector.shape_cast %77 : vector<128xf32> to vector<1x128xf32>
      %79 = vector.broadcast %78 : vector<1x128xf32> to vector<128x128xf32>
      %80 = arith.subf %27, %79 : vector<128x128xf32>
      %81 = math.exp %80 : vector<128x128xf32>
      %82 = vector.extract_strided_slice %22 {offsets = [0, 0, 0], sizes = [8, 1, 128], strides = [1, 1, 1]} : vector<8x16x128xf32> to vector<8x1x128xf32>
      %83 = vector.shape_cast %82 : vector<8x1x128xf32> to vector<8x128xf32>
      %84 = vector.broadcast %25 : vector<1x128xf32> to vector<8x128xf32>
      %85 = arith.addf %84, %83 : vector<8x128xf32>
      %86 = arith.index_cast %arg0 : i32 to index
      %87 = memref.load %arg2[%86] : memref<2xi32, #tpu.memory_space<smem>>
      %c1_i32_35 = arith.constant 1 : i32
      %88 = arith.subi %87, %c1_i32_35 : i32
      %89 = arith.addi %c1_i32_35, %88 : i32
      %c1_i32_36 = arith.constant 1 : i32
      %90 = scf.for %arg14 = %c1_i32_35 to %89 step %c1_i32_36 iter_args(%arg15 = %85) -> (vector<8x128xf32>)  : i32 {
        %c0_43 = arith.constant 0 : index
        %107 = arith.index_cast %arg14 : i32 to index
        %c0_44 = arith.constant 0 : index
        %108 = vector.load %arg13[%c0_43, %107, %c0_44] : memref<8x16x128xf32, #tpu.memory_space<vmem>>, vector<8x1x128xf32>
        %109 = vector.shape_cast %108 : vector<8x1x128xf32> to vector<8x128xf32>
        %110 = vector.extract_strided_slice %109 {offsets = [0, 127], sizes = [8, 1], strides = [1, 1]} : vector<8x128xf32> to vector<8x1xf32>
        %cst_45 = arith.constant dense<0xFF800000> : vector<8xf32>
        %111 = vector.multi_reduction <maximumf>, %arg15, %cst_45 [1] : vector<8x128xf32> to vector<8xf32>
        %112 = vector.shape_cast %111 : vector<8xf32> to vector<8x1xf32>
        %113 = vector.broadcast %112 : vector<8x1xf32> to vector<8x128xf32>
        %114 = arith.subf %arg15, %113 : vector<8x128xf32>
        %115 = math.exp %114 : vector<8x128xf32>
        %cst_46 = arith.constant dense<0.000000e+00> : vector<8x128xf32>
        %116 = tpu.matmul %115, %81, %cst_46 {dimension_numbers = #tpu.dot_dimension_numbers<[1], [0], [0], [1], [0, 0, 1, 1], [], []>} : vector<8x128xf32>, vector<128x128xf32>, vector<8x128xf32> -> vector<8x128xf32>
        %117 = vector.broadcast %112 : vector<8x1xf32> to vector<8x128xf32>
        %118 = vector.broadcast %78 : vector<1x128xf32> to vector<8x128xf32>
        %119 = arith.addf %117, %118 : vector<8x128xf32>
        %cst_47 = arith.constant 1.000000e-30 : f32
        %120 = vector.broadcast %cst_47 : f32 to vector<8x128xf32>
        %121 = arith.maximumf %116, %120 : vector<8x128xf32>
        %122 = math.log %121 : vector<8x128xf32>
        %123 = arith.addf %119, %122 : vector<8x128xf32>
        %124 = arith.addf %123, %109 : vector<8x128xf32>
        %cst_48 = arith.constant 0.000000e+00 : f32
        %125 = vector.broadcast %cst_48 : f32 to vector<8x1xf32>
        %126 = arith.cmpf ogt, %110, %125 : vector<8x1xf32>
        %127 = vector.shape_cast %126 : vector<8x1xi1> to vector<8x1xi1>
        %128 = vector.broadcast %127 : vector<8x1xi1> to vector<8x128xi1>
        %129 = arith.select %128, %124, %arg15 : vector<8x128xi1>, vector<8x128xf32>
        scf.yield %129 : vector<8x128xf32>
      }
      %91 = vector.broadcast %26 : vector<1x128xf32> to vector<8x128xf32>
      %92 = arith.addf %90, %91 : vector<8x128xf32>
      %cst_37 = arith.constant dense<0xFF800000> : vector<8xf32>
      %93 = vector.multi_reduction <maximumf>, %92, %cst_37 [1] : vector<8x128xf32> to vector<8xf32>
      %94 = vector.shape_cast %93 : vector<8xf32> to vector<8x1xf32>
      %95 = vector.broadcast %94 : vector<8x1xf32> to vector<8x128xf32>
      %96 = arith.subf %92, %95 : vector<8x128xf32>
      %97 = math.exp %96 : vector<8x128xf32>
      %cst_38 = arith.constant dense<0.000000e+00> : vector<8xf32>
      %98 = vector.multi_reduction <add>, %97, %cst_38 [1] : vector<8x128xf32> to vector<8xf32>
      %99 = vector.shape_cast %98 : vector<8xf32> to vector<8x1xf32>
      %100 = math.log %99 : vector<8x1xf32>
      %101 = arith.addf %94, %100 : vector<8x1xf32>
      %102 = arith.subf %76, %101 : vector<8x1xf32>
      %cst_39 = arith.constant dense<0.000000e+00> : vector<1xf32>
      %103 = vector.multi_reduction <add>, %102, %cst_39 [0] : vector<8x1xf32> to vector<1xf32>
      %104 = vector.shape_cast %103 : vector<1xf32> to vector<1x1xf32>
      %105 = vector.shape_cast %104 : vector<1x1xf32> to vector<1x1x1xf32>
      %c0_40 = arith.constant 0 : index
      %c0_41 = arith.constant 0 : index
      %c0_42 = arith.constant 0 : index
      %106 = vector.load %arg12[%c0_40, %c0_41, %c0_42] : memref<1x1x1xf32, #tpu.memory_space<vmem>>, vector<1x1x1xf32>
      tpu.vector_store %arg12[%c0_40, %c0_41, %c0_42], %105 {strides = array<i32>} : memref<1x1x1xf32, #tpu.memory_space<vmem>>, vector<1x1x1xf32>,
    } else {
    }
    return
  }
  func.func @transform_0(%arg0: i32, %arg1: i32, %arg2: memref<2xi32, #tpu.memory_space<smem>>) -> (i32, i32, i32) {
    %c0_i32 = arith.constant 0 : i32
    %c0_i32_0 = arith.constant 0 : i32
    return %arg0, %arg1, %c0_i32 : i32, i32, i32
  }
  func.func @transform_1(%arg0: i32, %arg1: i32, %arg2: memref<2xi32, #tpu.memory_space<smem>>) -> (i32, i32) {
    %c0_i32 = arith.constant 0 : i32
    %c0_i32_0 = arith.constant 0 : i32
    %c0_i32_1 = arith.constant 0 : i32
    return %c0_i32, %c0_i32_0 : i32, i32
  }
  func.func @transform_2(%arg0: i32, %arg1: i32, %arg2: memref<2xi32, #tpu.memory_space<smem>>) -> (i32, i32) {
    %c0_i32 = arith.constant 0 : i32
    %c0_i32_0 = arith.constant 0 : i32
    %c0_i32_1 = arith.constant 0 : i32
    return %c0_i32, %c0_i32_0 : i32, i32
  }
  func.func @transform_3(%arg0: i32, %arg1: i32, %arg2: memref<2xi32, #tpu.memory_space<smem>>) -> (i32, i32) {
    %c0_i32 = arith.constant 0 : i32
    %c0_i32_0 = arith.constant 0 : i32
    return %arg0, %c0_i32 : i32, i32
  }
  func.func @transform_4(%arg0: i32, %arg1: i32, %arg2: memref<2xi32, #tpu.memory_space<smem>>) -> (i32, i32, i32) {
    %c0_i32 = arith.constant 0 : i32
    %c0_i32_0 = arith.constant 0 : i32
    return %arg0, %arg1, %c0_i32 : i32, i32, i32
  }
  func.func @transform_5(%arg0: i32, %arg1: i32, %arg2: memref<2xi32, #tpu.memory_space<smem>>) -> (i32, i32) {
    %c0_i32 = arith.constant 0 : i32
    %c0_i32_0 = arith.constant 0 : i32
    return %arg0, %c0_i32 : i32, i32
  }
  func.func @transform_6(%arg0: i32, %arg1: i32, %arg2: memref<2xi32, #tpu.memory_space<smem>>) -> (i32, i32) {
    %c0_i32 = arith.constant 0 : i32
    %c0_i32_0 = arith.constant 0 : i32
    %c0_i32_1 = arith.constant 0 : i32
    return %c0_i32, %c0_i32_0 : i32, i32
  }
  func.func @transform_7(%arg0: i32, %arg1: i32, %arg2: memref<2xi32, #tpu.memory_space<smem>>) -> (i32, i32) {
    %c0_i32 = arith.constant 0 : i32
    %c0_i32_0 = arith.constant 0 : i32
    %c0_i32_1 = arith.constant 0 : i32
    return %c0_i32, %c0_i32_0 : i32, i32
  }
  func.func @transform_8(%arg0: i32, %arg1: i32, %arg2: memref<2xi32, #tpu.memory_space<smem>>) -> (i32, i32) {
    %c0_i32 = arith.constant 0 : i32
    %c0_i32_0 = arith.constant 0 : i32
    %c0_i32_1 = arith.constant 0 : i32
    return %c0_i32, %c0_i32_0 : i32, i32
  }
  func.func @transform_9(%arg0: i32, %arg1: i32, %arg2: memref<2xi32, #tpu.memory_space<smem>>) -> (i32, i32, i32) {
    %c0_i32 = arith.constant 0 : i32
    %c0_i32_0 = arith.constant 0 : i32
    %c0_i32_1 = arith.constant 0 : i32
    return %arg0, %c0_i32, %c0_i32_0 : i32, i32, i32
  }
}

</mosaic_0001>

<llo_original>
// kernel: tpu_custom_call.1
$region0: #{tpu_custom_call.1}
  #allocation0 [shape = 'u32[]', space=smem, size = 0x4, offset = 0x4, fixed_abs, tag = 'smem constant byte address 0x4 - core index']
  #allocation1 [shape = 'u32[144,128]{1,0:T(1,128)}', space=vmem, size = 0x12000, scoped, tag = 'internal scratch']
  #allocation2 [shape = 'f32[8,16,128]{2,1,0:T(8,128)}', space=vmem, size = 0x10000, scoped, tag = 'scratch operand']
  #allocation3 [shape = 's32[1]{0}', space=sflag, size = 0x4, scoped, tag = 'scoped memory for tpu_custom_call.1']
  #allocation4 [shape = 'u8[512]{0}', space=smem, size = 0x200, scoped, tag = 'prefetched SMEM operand 0']
  %s0 = inlined_call_operand.vmem [shape: s32[2], index: 0, kind: input, shape index: {}]
  %s1 = inlined_call_operand.vmem [shape: f32[16,16,32], index: 1, kind: input, shape index: {}]
  %s2 = inlined_call_operand.hbm [shape: f32[32,128], index: 2, kind: input, shape index: {}]
  %s3 = inlined_call_operand.vmem [shape: f32[1,128], index: 3, kind: input, shape index: {}]
  %s4 = inlined_call_operand.vmem [shape: s32[16,16], index: 4, kind: input, shape index: {}]
  %s5 = inlined_call_operand.vmem [shape: f32[16,16,1], index: 5, kind: input, shape index: {}]
  %s6 = inlined_call_operand.hbm [shape: f32[16,16], index: 6, kind: input, shape index: {}]
  %s7 = inlined_call_operand.vmem [shape: f32[1,128], index: 7, kind: input, shape index: {}]
  %s8 = inlined_call_operand.vmem [shape: f32[1,128], index: 8, kind: input, shape index: {}]
  %s9 = inlined_call_operand.hbm [shape: f32[128,128], index: 9, kind: input, shape index: {}]
  %s10 = inlined_call_operand.vmem [shape: f32[2,1,1], index: 10, kind: output, shape index: {}]
  %s11 = sld [smem:[#allocation0]]
  $region168: #{tpu_custom_call.1} parent=0
    _
  %s13 = ssub.s32 1, %s11
  %s14 = scalar_select 0, %s13, %s11
  %s15 = sshll.u32 %s0, 4
  %s16 = int_to_ptr.vmem [resolvable:$true] %s15
  %18 = dma.vmem_to_smem %s16, 16, [#allocation4], [#allocation3]
  %19 = dma.done [#allocation3], 16
  %20 = sfence
  $region1: #{tpu_custom_call.1} parent=0
    #allocation5 [shape = 'u8[65536]{0}', space=vmem, size = 0x10000, scoped, tag = 'input window, operand 1']
    #allocation6 [shape = 'u8[16384]{0}', space=vmem, size = 0x4000, scoped, tag = 'input window, operand 2, single buffered']
    #allocation7 [shape = 's32[2]{0}', space=sflag, size = 0x8, scoped, tag = 'scoped memory for tpu_custom_call.1']
    #allocation8 [shape = 'u8[65536]{0}', space=vmem, size = 0x10000, scoped, tag = 'input window, operand 5']
    #allocation9 [shape = 'u8[8192]{0}', space=vmem, size = 0x2000, scoped, tag = 'input window, operand 6']
    #allocation10 [shape = 's32[2]{0}', space=sflag, size = 0x8, scoped, tag = 'scoped memory for tpu_custom_call.1']
    #allocation11 [shape = 'u8[65536]{0}', space=vmem, size = 0x10000, scoped, tag = 'input window, operand 9, single buffered']
    %21 = vsyncpa [#allocation7], 0
    %22 = vsyncpa [#allocation10], 0
    %s23 = scalar_lea.sflag [#allocation10], 1
    %24 = vsyncpa %s23, 0
    loop: start=0, step=1, limit=6
    $region2: #{tpu_custom_call.1} parent=1 // loop_pre_header
      _
    $region3: #{tpu_custom_call.1} parent=1 // loop_header
      %s26 = sphi 0, %s30
      %p27 = scmp.ge.s32.totalorder %s26, 6
      %s33 = sphi 0, %s45
      %s34 = sphi 0, %s41
      %s35 = sphi 0, %s33
      %s36 = sphi 0, %s34
      %s37 = sphi 0, %s35
      %s38 = sphi 0, %s36
      %s50 = sphi 0, %s52
      %s53 = sphi 0, %s50
      %s54 = sphi 0, %s53
      %s70 = sphi 0, %s54
      %s74 = sphi 0, %s74
      %s76 = sphi 0, %s74
      %s77 = sphi 0, %s76
      %s91 = sphi 0, %s77
      %s95 = sphi 0, %s95
      %s97 = sphi 0, %s95
      %s98 = sphi 0, %s97
      %s112 = sphi 0, %s98
      %s118 = sphi 0, %s120
      %s121 = sphi 0, %s118
      %s122 = sphi 0, %s121
      %s138 = sphi 0, %s122
      %s146 = sphi 0, %s148
      %s149 = sphi 0, %s146
      %s150 = sphi 0, %s149
      %s166 = sphi 0, %s150
      %s172 = sphi 0, %s174
      %s175 = sphi 0, %s172
      %s176 = sphi 0, %s175
      %s192 = sphi 0, %s176
      %s196 = sphi 0, %s196
      %s198 = sphi 0, %s196
      %s199 = sphi 0, %s198
      %s213 = sphi 0, %s199
      %s217 = sphi 0, %s217
      %s219 = sphi 0, %s217
      %s220 = sphi 0, %s219
      %s234 = sphi 0, %s220
      %s238 = sphi 0, %s238
      %s240 = sphi 0, %s238
      %s241 = sphi 0, %s240
      %s255 = sphi 0, %s241
      %s261 = sphi 0, %s263
      %s264 = sphi 0, %s261
      %s265 = sphi 0, %s264
      %s281 = sphi 0, %s265
    $region4: #{tpu_custom_call.1} parent=1 // loop_header_branch
      %29 = sbr.rel (%p27) target = $region8
    $region5: #{tpu_custom_call.1} parent=1 // loop_body
      %s31 = ssub.s32 %s26, 1
      %s32 = ssub.s32 %s26, 2
      %s39 = sadd.s32 1, %s34
      %p40 = scmp.ge.s32.totalorder %s39, 2
      %s41 = scalar_select %p40, 0, %s39
      %s42 = sadd.s32 1, %s33
      %s43 = scalar_select %p40, %s42, %s33
      %p44 = scmp.ge.s32.totalorder %s43, 2
      %s45 = scalar_select %p44, 0, %s43
      %s46 = ssub.s32 %s33, %s45
      %s47 = ssub.s32 %s34, %s41
      %s48 = sor.u32 %s46, %s47
      %p49 = scmp.eq.s32.totalorder %s48, 0
      %s51 = sadd.s32 %s50, 1
      %s52 = scalar_select %p49, %s50, %s51
      %p55 = pneg %p49
      %p56 = scmp.eq.s32.totalorder %s26, 3
      %p57 = por %p55, %p56
      %p58 = scmp.ne.s32.totalorder %s50, %s53
      %p59 = scmp.eq.s32.totalorder %s26, 0
      %p60 = por %p58, %p59
      %p61 = scmp.ne.s32.totalorder %s50, %s53
      %p62 = scmp.eq.s32.totalorder %s31, 3
      %p63 = por %p61, %p62
      %p64 = scmp.ne.s32.totalorder %s53, %s54
      %p65 = scmp.eq.s32.totalorder %s31, 0
      %p66 = por %p64, %p65
      %p67 = scmp.ne.s32.totalorder %s53, %s54
      %p68 = scmp.eq.s32.totalorder %s32, 3
      %p69 = por %p67, %p68
      %p71 = scmp.ne.s32.totalorder %s54, %s70
      %p72 = scmp.eq.s32.totalorder %s32, 0
      %p73 = por %p71, %p72
      %s75 = sadd.s32 %s74, 1
      %p78 = scmp.eq.s32.totalorder %s26, 3
      %p79 = scmp.ne.s32.totalorder %s74, %s76
      %p80 = scmp.eq.s32.totalorder %s26, 0
      %p81 = por %p79, %p80
      %p82 = scmp.ne.s32.totalorder %s74, %s76
      %p83 = scmp.eq.s32.totalorder %s31, 3
      %p84 = por %p82, %p83
      %p85 = scmp.ne.s32.totalorder %s76, %s77
      %p86 = scmp.eq.s32.totalorder %s31, 0
      %p87 = por %p85, %p86
      %p88 = scmp.ne.s32.totalorder %s76, %s77
      %p89 = scmp.eq.s32.totalorder %s32, 3
      %p90 = por %p88, %p89
      %p92 = scmp.ne.s32.totalorder %s77, %s91
      %p93 = scmp.eq.s32.totalorder %s32, 0
      %p94 = por %p92, %p93
      %s96 = sadd.s32 %s95, 1
      %p99 = scmp.eq.s32.totalorder %s26, 3
      %p100 = scmp.ne.s32.totalorder %s95, %s97
      %p101 = scmp.eq.s32.totalorder %s26, 0
      %p102 = por %p100, %p101
      %p103 = scmp.ne.s32.totalorder %s95, %s97
      %p104 = scmp.eq.s32.totalorder %s31, 3
      %p105 = por %p103, %p104
      %p106 = scmp.ne.s32.totalorder %s97, %s98
      %p107 = scmp.eq.s32.totalorder %s31, 0
      %p108 = por %p106, %p107
      %p109 = scmp.ne.s32.totalorder %s97, %s98
      %p110 = scmp.eq.s32.totalorder %s32, 3
      %p111 = por %p109, %p110
      %p113 = scmp.ne.s32.totalorder %s98, %s112
      %p114 = scmp.eq.s32.totalorder %s32, 0
      %p115 = por %p113, %p114
      %s116 = ssub.s32 %s33, %s45
      %p117 = scmp.eq.s32.totalorder %s116, 0
      %s119 = sadd.s32 %s118, 1
      %s120 = scalar_select %p117, %s118, %s119
      %p123 = pneg %p117
      %p124 = scmp.eq.s32.totalorder %s26, 3
      %p125 = por %p123, %p124
      %p126 = scmp.ne.s32.totalorder %s118, %s121
      %p127 = scmp.eq.s32.totalorder %s26, 0
      %p128 = por %p126, %p127
      %p129 = scmp.ne.s32.totalorder %s118, %s121
      %p130 = scmp.eq.s32.totalorder %s31, 3
      %p131 = por %p129, %p130
      %p132 = scmp.ne.s32.totalorder %s121, %s122
      %p133 = scmp.eq.s32.totalorder %s31, 0
      %p134 = por %p132, %p133
      %p135 = scmp.ne.s32.totalorder %s121, %s122
      %p136 = scmp.eq.s32.totalorder %s32, 3
      %p137 = por %p135, %p136
      %p139 = scmp.ne.s32.totalorder %s122, %s138
      %p140 = scmp.eq.s32.totalorder %s32, 0
      %p141 = por %p139, %p140
      %s142 = ssub.s32 %s33, %s45
      %s143 = ssub.s32 %s34, %s41
      %s144 = sor.u32 %s142, %s143
      %p145 = scmp.eq.s32.totalorder %s144, 0
      %s147 = sadd.s32 %s146, 1
      %s148 = scalar_select %p145, %s146, %s147
      %p151 = pneg %p145
      %p152 = scmp.eq.s32.totalorder %s26, 3
      %p153 = por %p151, %p152
      %p154 = scmp.ne.s32.totalorder %s146, %s149
      %p155 = scmp.eq.s32.totalorder %s26, 0
      %p156 = por %p154, %p155
      %p157 = scmp.ne.s32.totalorder %s146, %s149
      %p158 = scmp.eq.s32.totalorder %s31, 3
      %p159 = por %p157, %p158
      %p160 = scmp.ne.s32.totalorder %s149, %s150
      %p161 = scmp.eq.s32.totalorder %s31, 0
      %p162 = por %p160, %p161
      %p163 = scmp.ne.s32.totalorder %s149, %s150
      %p164 = scmp.eq.s32.totalorder %s32, 3
      %p165 = por %p163, %p164
      %p167 = scmp.ne.s32.totalorder %s150, %s166
      %p168 = scmp.eq.s32.totalorder %s32, 0
      %p169 = por %p167, %p168
      %s170 = ssub.s32 %s33, %s45
      %p171 = scmp.eq.s32.totalorder %s170, 0
      %s173 = sadd.s32 %s172, 1
      %s174 = scalar_select %p171, %s172, %s173
      %p177 = pneg %p171
      %p178 = scmp.eq.s32.totalorder %s26, 3
      %p179 = por %p177, %p178
      %p180 = scmp.ne.s32.totalorder %s172, %s175
      %p181 = scmp.eq.s32.totalorder %s26, 0
      %p182 = por %p180, %p181
      %p183 = scmp.ne.s32.totalorder %s172, %s175
      %p184 = scmp.eq.s32.totalorder %s31, 3
      %p185 = por %p183, %p184
      %p186 = scmp.ne.s32.totalorder %s175, %s176
      %p187 = scmp.eq.s32.totalorder %s31, 0
      %p188 = por %p186, %p187
      %p189 = scmp.ne.s32.totalorder %s175, %s176
      %p190 = scmp.eq.s32.totalorder %s32, 3
      %p191 = por %p189, %p190
      %p193 = scmp.ne.s32.totalorder %s176, %s192
      %p194 = scmp.eq.s32.totalorder %s32, 0
      %p195 = por %p193, %p194
      %s197 = sadd.s32 %s196, 1
      %p200 = scmp.eq.s32.totalorder %s26, 3
      %p201 = scmp.ne.s32.totalorder %s196, %s198
      %p202 = scmp.eq.s32.totalorder %s26, 0
      %p203 = por %p201, %p202
      %p204 = scmp.ne.s32.totalorder %s196, %s198
      %p205 = scmp.eq.s32.totalorder %s31, 3
      %p206 = por %p204, %p205
      %p207 = scmp.ne.s32.totalorder %s198, %s199
      %p208 = scmp.eq.s32.totalorder %s31, 0
      %p209 = por %p207, %p208
      %p210 = scmp.ne.s32.totalorder %s198, %s199
      %p211 = scmp.eq.s32.totalorder %s32, 3
      %p212 = por %p210, %p211
      %p214 = scmp.ne.s32.totalorder %s199, %s213
      %p215 = scmp.eq.s32.totalorder %s32, 0
      %p216 = por %p214, %p215
      %s218 = sadd.s32 %s217, 1
      %p221 = scmp.eq.s32.totalorder %s26, 3
      %p222 = scmp.ne.s32.totalorder %s217, %s219
      %p223 = scmp.eq.s32.totalorder %s26, 0
      %p224 = por %p222, %p223
      %p225 = scmp.ne.s32.totalorder %s217, %s219
      %p226 = scmp.eq.s32.totalorder %s31, 3
      %p227 = por %p225, %p226
      %p228 = scmp.ne.s32.totalorder %s219, %s220
      %p229 = scmp.eq.s32.totalorder %s31, 0
      %p230 = por %p228, %p229
      %p231 = scmp.ne.s32.totalorder %s219, %s220
      %p232 = scmp.eq.s32.totalorder %s32, 3
      %p233 = por %p231, %p232
      %p235 = scmp.ne.s32.totalorder %s220, %s234
      %p236 = scmp.eq.s32.totalorder %s32, 0
      %p237 = por %p235, %p236
      %s239 = sadd.s32 %s238, 1
      %p242 = scmp.eq.s32.totalorder %s26, 3
      %p243 = scmp.ne.s32.totalorder %s238, %s240
      %p244 = scmp.eq.s32.totalorder %s26, 0
      %p245 = por %p243, %p244
      %p246 = scmp.ne.s32.totalorder %s238, %s240
      %p247 = scmp.eq.s32.totalorder %s31, 3
      %p248 = por %p246, %p247
      %p249 = scmp.ne.s32.totalorder %s240, %s241
      %p250 = scmp.eq.s32.totalorder %s31, 0
      %p251 = por %p249, %p250
      %p252 = scmp.ne.s32.totalorder %s240, %s241
      %p253 = scmp.eq.s32.totalorder %s32, 3
      %p254 = por %p252, %p253
      %p256 = scmp.ne.s32.totalorder %s241, %s255
      %p257 = scmp.eq.s32.totalorder %s32, 0
      %p258 = por %p256, %p257
      %s259 = ssub.s32 %s33, %s45
      %p260 = scmp.eq.s32.totalorder %s259, 0
      %s262 = sadd.s32 %s261, 1
      %s263 = scalar_select %p260, %s261, %s262
      %p266 = pneg %p260
      %p267 = scmp.eq.s32.totalorder %s26, 3
      %p268 = por %p266, %p267
      %p269 = scmp.ne.s32.totalorder %s261, %s264
      %p270 = scmp.eq.s32.totalorder %s26, 0
      %p271 = por %p269, %p270
      %p272 = scmp.ne.s32.totalorder %s261, %s264
      %p273 = scmp.eq.s32.totalorder %s31, 3
      %p274 = por %p272, %p273
      %p275 = scmp.ne.s32.totalorder %s264, %s265
      %p276 = scmp.eq.s32.totalorder %s31, 0
      %p277 = por %p275, %p276
      %p278 = scmp.ne.s32.totalorder %s264, %s265
      %p279 = scmp.eq.s32.totalorder %s32, 3
      %p280 = por %p278, %p279
      %p282 = scmp.ne.s32.totalorder %s265, %s281
      %p283 = scmp.eq.s32.totalorder %s32, 0
      %p284 = por %p282, %p283
      %p285 = scmp.le.s32.totalorder 1, %s26
      %p286 = scmp.lt.s32.totalorder %s26, 5
      %p287 = pnand %p285, %p286
      %p288 = pneg %p287
      // Predicated region
      $region9: #{tpu_custom_call.1} parent=5 // pred_check
        _
      $region10: #{tpu_custom_call.1} parent=5 // pred_check_branch
        %290 = sbr.rel (%p287) target = $region12
      $region11: #{tpu_custom_call.1} parent=5 // pred_region
        %s291 = ssub.s32 %s26, 1
        // Predicated region
        $region13: #{tpu_custom_call.1} parent=11 // pred_check
          %p292 = pneg %p87
        $region14: #{tpu_custom_call.1} parent=11 // pred_check_branch
          %294 = sbr.rel (%p292) target = $region16
        $region15: #{tpu_custom_call.1} parent=11 // pred_region
          %s296 = ssub.s32 512, 512
          %297 = vsyncadd [#allocation7], %s296
          %s298 = sshll.u32 [#allocation6], 4
          %s299 = int_to_ptr.vmem [resolvable:$true] %s298
          %304 = dma.hbm_to_vmem [thread:$0]  %s2, 512, %s299, [#allocation7], 128, 128, 8
        $region16: #{tpu_custom_call.1} parent=11 // pred_fallthru
          _
        // Predicated region
        $region17: #{tpu_custom_call.1} parent=11 // pred_check
          %p305 = pneg %p108
        $region18: #{tpu_custom_call.1} parent=11 // pred_check_branch
          %307 = sbr.rel (%p305) target = $region20
        $region19: #{tpu_custom_call.1} parent=11 // pred_region
          _
        $region20: #{tpu_custom_call.1} parent=11 // pred_fallthru
          _
        // Predicated region
        $region21: #{tpu_custom_call.1} parent=11 // pred_check
          %p308 = pneg %p209
        $region22: #{tpu_custom_call.1} parent=11 // pred_check_branch
          %310 = sbr.rel (%p308) target = $region24
        $region23: #{tpu_custom_call.1} parent=11 // pred_region
          _
        $region24: #{tpu_custom_call.1} parent=11 // pred_fallthru
          _
        // Predicated region
        $region25: #{tpu_custom_call.1} parent=11 // pred_check
          %p311 = pneg %p230
        $region26: #{tpu_custom_call.1} parent=11 // pred_check_branch
          %313 = sbr.rel (%p311) target = $region28
        $region27: #{tpu_custom_call.1} parent=11 // pred_region
          _
        $region28: #{tpu_custom_call.1} parent=11 // pred_fallthru
          _
        // Predicated region
        $region29: #{tpu_custom_call.1} parent=11 // pred_check
          %p314 = pneg %p251
        $region30: #{tpu_custom_call.1} parent=11 // pred_check_branch
          %316 = sbr.rel (%p314) target = $region32
        $region31: #{tpu_custom_call.1} parent=11 // pred_region
          %s318 = ssub.s32 2048, 2048
          %319 = vsyncadd [#allocation10], %s318
          %s320 = sshll.u32 [#allocation11], 4
          %s321 = int_to_ptr.vmem [resolvable:$true] %s320
          %326 = dma.hbm_to_vmem [thread:$0]  %s9, 2048, %s321, [#allocation10], 128, 128, 8
        $region32: #{tpu_custom_call.1} parent=11 // pred_fallthru
          _
      $region12: #{tpu_custom_call.1} parent=5 // pred_fallthru
        _
      %p327 = scmp.lt.s32.totalorder %s26, 4
      // Predicated region
      $region33: #{tpu_custom_call.1} parent=5 // pred_check
        %p328 = pneg %p327
      $region34: #{tpu_custom_call.1} parent=5 // pred_check_branch
        %330 = sbr.rel (%p328) target = $region36
      $region35: #{tpu_custom_call.1} parent=5 // pred_region
        // Predicated region
        $region37: #{tpu_custom_call.1} parent=35 // pred_check
          %p331 = pneg %p60
        $region38: #{tpu_custom_call.1} parent=35 // pred_check_branch
          %333 = sbr.rel (%p331) target = $region40
        $region39: #{tpu_custom_call.1} parent=35 // pred_region
          %s334 = sand.u32 %s50, 1
          %s335 = sand.u32 %s50, 1
          %s336 = smul.addr %s335, 64
          %s337 = scalar_lea.vmem [#allocation5], %s336
          %s338 = smul.u32 8, %s33
          %s339 = smul.addr %s338, 2
          %s340 = sadd.s32 %s34, %s339
          %s341 = smul.addr %s340, 8
          %s342 = scalar_lea.vmem %s1, %s341
          // Predicated region
          $region41: #{tpu_custom_call.1} parent=39 // pred_check
            _
          $region42: #{tpu_custom_call.1} parent=39 // pred_check_branch
            %344 = sbr.rel (0) target = $region44
          $region43: #{tpu_custom_call.1} parent=39 // pred_region
            // Predicated region
            $region45: #{tpu_custom_call.1} parent=43 // pred_check
              _
            $region46: #{tpu_custom_call.1} parent=43 // pred_check_branch
              %346 = sbr.rel (0) target = $region48
            $region47: #{tpu_custom_call.1} parent=43 // pred_region
              // Predicated region
              $region60: #{tpu_custom_call.1} parent=47 // pred_check
                _
              $region61: #{tpu_custom_call.1} parent=47 // pred_check_branch
                %376 = sbr.rel (0) target = $region63
              $region62: #{tpu_custom_call.1} parent=47 // pred_region
                loop: start=0, step=1, limit=1
                $region64: #{tpu_custom_call.1} parent=62 // loop_pre_header
                  _
                $region65: #{tpu_custom_call.1} parent=62 // loop_header
                  %s378 = sphi 0, %s382
                  %p379 = scmp.ge.s32.totalorder %s378, 1
                  %s383 = sphi %s342, %s342
                  %s384 = sphi %s337, %s337
                $region66: #{tpu_custom_call.1} parent=62 // loop_header_branch
                  %381 = sbr.rel (%p379) target = $region70
                $region67: #{tpu_custom_call.1} parent=62 // loop_body
                  %v385 = vld [vmem:[%s383] sm:$0xff]
                  %386 = vst [vmem:[%s384] sm:$0xff] %v385
                  %v387 = vld [vmem:[%s383 + $0x10] sm:$0xff]
                  %388 = vst [vmem:[%s384 + $0x8] sm:$0xff] %v387
                  %v389 = vld [vmem:[%s383 + $0x20] sm:$0xff]
                  %390 = vst [vmem:[%s384 + $0x10] sm:$0xff] %v389
                  %v391 = vld [vmem:[%s383 + $0x30] sm:$0xff]
                  %392 = vst [vmem:[%s384 + $0x18] sm:$0xff] %v391
                  %v393 = vld [vmem:[%s383 + $0x40] sm:$0xff]
                  %394 = vst [vmem:[%s384 + $0x20] sm:$0xff] %v393
                  %v395 = vld [vmem:[%s383 + $0x50] sm:$0xff]
                  %396 = vst [vmem:[%s384 + $0x28] sm:$0xff] %v395
                  %v397 = vld [vmem:[%s383 + $0x60] sm:$0xff]
                  %398 = vst [vmem:[%s384 + $0x30] sm:$0xff] %v397
                  %v399 = vld [vmem:[%s383 + $0x70] sm:$0xff]
                  %400 = vst [vmem:[%s384 + $0x38] sm:$0xff] %v399
                $region68: #{tpu_custom_call.1} parent=62 // loop_footer
                  %s382 = sadd.s32 1, %s378
                $region69: #{tpu_custom_call.1} parent=62 // loop_footer_branch
                  %377 = sbr.rel target = $region65
                $region70: #{tpu_custom_call.1} parent=62 // loop_exit
                  _
              $region63: #{tpu_custom_call.1} parent=47 // pred_fallthru
                _
              // Predicated region
              $region71: #{tpu_custom_call.1} parent=47 // pred_check
                _
              $region72: #{tpu_custom_call.1} parent=47 // pred_check_branch
                %402 = sbr.rel target = $region74
              $region73: #{tpu_custom_call.1} parent=47 // pred_region
                _
              $region74: #{tpu_custom_call.1} parent=47 // pred_fallthru
                _
            $region48: #{tpu_custom_call.1} parent=43 // pred_fallthru
              _
            // Predicated region
            $region49: #{tpu_custom_call.1} parent=43 // pred_check
              _
            $region50: #{tpu_custom_call.1} parent=43 // pred_check_branch
              %348 = sbr.rel target = $region52
            $region51: #{tpu_custom_call.1} parent=43 // pred_region
              %s350 = ssub.s32 256, 1
              loop: start=0, step=1, limit=1
              $region53: #{tpu_custom_call.1} parent=51 // loop_pre_header
                _
              $region54: #{tpu_custom_call.1} parent=51 // loop_header
                %s352 = sphi 0, %s356
                %p353 = scmp.ge.s32.totalorder %s352, 1
                %s357 = sphi %s342, %s342
                %s358 = sphi %s337, %s337
              $region55: #{tpu_custom_call.1} parent=51 // loop_header_branch
                %355 = sbr.rel (%p353) target = $region59
              $region56: #{tpu_custom_call.1} parent=51 // loop_body
                %v359 = vld [vmem:[%s357] sm:%s350]
                %360 = vst [vmem:[%s358] sm:%s350] %v359
                %v361 = vld [vmem:[%s357 + $0x10] sm:%s350]
                %362 = vst [vmem:[%s358 + $0x8] sm:%s350] %v361
                %v363 = vld [vmem:[%s357 + $0x20] sm:%s350]
                %364 = vst [vmem:[%s358 + $0x10] sm:%s350] %v363
                %v365 = vld [vmem:[%s357 + $0x30] sm:%s350]
                %366 = vst [vmem:[%s358 + $0x18] sm:%s350] %v365
                %v367 = vld [vmem:[%s357 + $0x40] sm:%s350]
                %368 = vst [vmem:[%s358 + $0x20] sm:%s350] %v367
                %v369 = vld [vmem:[%s357 + $0x50] sm:%s350]
                %370 = vst [vmem:[%s358 + $0x28] sm:%s350] %v369
                %v371 = vld [vmem:[%s357 + $0x60] sm:%s350]
                %372 = vst [vmem:[%s358 + $0x30] sm:%s350] %v371
                %v373 = vld [vmem:[%s357 + $0x70] sm:%s350]
                %374 = vst [vmem:[%s358 + $0x38] sm:%s350] %v373
              $region57: #{tpu_custom_call.1} parent=51 // loop_footer
                %s356 = sadd.s32 1, %s352
              $region58: #{tpu_custom_call.1} parent=51 // loop_footer_branch
                %351 = sbr.rel target = $region54
              $region59: #{tpu_custom_call.1} parent=51 // loop_exit
                _
            $region52: #{tpu_custom_call.1} parent=43 // pred_fallthru
              _
          $region44: #{tpu_custom_call.1} parent=39 // pred_fallthru
            _
          %403 = vnop
        $region40: #{tpu_custom_call.1} parent=35 // pred_fallthru
          _
        // Predicated region
        $region75: #{tpu_custom_call.1} parent=35 // pred_check
          %p404 = pneg %p128
        $region76: #{tpu_custom_call.1} parent=35 // pred_check_branch
          %406 = sbr.rel (%p404) target = $region78
        $region77: #{tpu_custom_call.1} parent=35 // pred_region
          %p407 = scmp.lt.s32.totalorder %s33, 1
          %s408 = scalar_select %p407, %s33, 1
          %s409 = smul.addr %s408, 8
          %s410 = scalar_lea.vmem %s4, %s409
        $region78: #{tpu_custom_call.1} parent=35 // pred_fallthru
          _
        // Predicated region
        $region79: #{tpu_custom_call.1} parent=35 // pred_check
          %p411 = pneg %p156
        $region80: #{tpu_custom_call.1} parent=35 // pred_check_branch
          %413 = sbr.rel (%p411) target = $region82
        $region81: #{tpu_custom_call.1} parent=35 // pred_region
          %s414 = sand.u32 %s146, 1
          %s415 = sand.u32 %s146, 1
          %s416 = smul.addr %s415, 64
          %s417 = scalar_lea.vmem [#allocation8], %s416
          %s418 = smul.u32 8, %s33
          %s419 = smul.addr %s418, 2
          %s420 = sadd.s32 %s34, %s419
          %s421 = smul.addr %s420, 8
          %s422 = scalar_lea.vmem %s5, %s421
          // Predicated region
          $region83: #{tpu_custom_call.1} parent=81 // pred_check
            _
          $region84: #{tpu_custom_call.1} parent=81 // pred_check_branch
            %424 = sbr.rel (0) target = $region86
          $region85: #{tpu_custom_call.1} parent=81 // pred_region
            // Predicated region
            $region87: #{tpu_custom_call.1} parent=85 // pred_check
              _
            $region88: #{tpu_custom_call.1} parent=85 // pred_check_branch
              %426 = sbr.rel (0) target = $region90
            $region89: #{tpu_custom_call.1} parent=85 // pred_region
              // Predicated region
              $region102: #{tpu_custom_call.1} parent=89 // pred_check
                _
              $region103: #{tpu_custom_call.1} parent=89 // pred_check_branch
                %456 = sbr.rel (0) target = $region105
              $region104: #{tpu_custom_call.1} parent=89 // pred_region
                loop: start=0, step=1, limit=1
                $region106: #{tpu_custom_call.1} parent=104 // loop_pre_header
                  _
                $region107: #{tpu_custom_call.1} parent=104 // loop_header
                  %s458 = sphi 0, %s462
                  %p459 = scmp.ge.s32.totalorder %s458, 1
                  %s463 = sphi %s422, %s422
                  %s464 = sphi %s417, %s417
                $region108: #{tpu_custom_call.1} parent=104 // loop_header_branch
                  %461 = sbr.rel (%p459) target = $region112
                $region109: #{tpu_custom_call.1} parent=104 // loop_body
                  %v465 = vld [vmem:[%s463] sm:$0xff]
                  %466 = vst [vmem:[%s464] sm:$0xff] %v465
                  %v467 = vld [vmem:[%s463 + $0x10] sm:$0xff]
                  %468 = vst [vmem:[%s464 + $0x8] sm:$0xff] %v467
                  %v469 = vld [vmem:[%s463 + $0x20] sm:$0xff]
                  %470 = vst [vmem:[%s464 + $0x10] sm:$0xff] %v469
                  %v471 = vld [vmem:[%s463 + $0x30] sm:$0xff]
                  %472 = vst [vmem:[%s464 + $0x18] sm:$0xff] %v471
                  %v473 = vld [vmem:[%s463 + $0x40] sm:$0xff]
                  %474 = vst [vmem:[%s464 + $0x20] sm:$0xff] %v473
                  %v475 = vld [vmem:[%s463 + $0x50] sm:$0xff]
                  %476 = vst [vmem:[%s464 + $0x28] sm:$0xff] %v475
                  %v477 = vld [vmem:[%s463 + $0x60] sm:$0xff]
                  %478 = vst [vmem:[%s464 + $0x30] sm:$0xff] %v477
                  %v479 = vld [vmem:[%s463 + $0x70] sm:$0xff]
                  %480 = vst [vmem:[%s464 + $0x38] sm:$0xff] %v479
                $region110: #{tpu_custom_call.1} parent=104 // loop_footer
                  %s462 = sadd.s32 1, %s458
                $region111: #{tpu_custom_call.1} parent=104 // loop_footer_branch
                  %457 = sbr.rel target = $region107
                $region112: #{tpu_custom_call.1} parent=104 // loop_exit
                  _
              $region105: #{tpu_custom_call.1} parent=89 // pred_fallthru
                _
              // Predicated region
              $region113: #{tpu_custom_call.1} parent=89 // pred_check
                _
              $region114: #{tpu_custom_call.1} parent=89 // pred_check_branch
                %482 = sbr.rel target = $region116
              $region115: #{tpu_custom_call.1} parent=89 // pred_region
                _
              $region116: #{tpu_custom_call.1} parent=89 // pred_fallthru
                _
            $region90: #{tpu_custom_call.1} parent=85 // pred_fallthru
              _
            // Predicated region
            $region91: #{tpu_custom_call.1} parent=85 // pred_check
              _
            $region92: #{tpu_custom_call.1} parent=85 // pred_check_branch
              %428 = sbr.rel target = $region94
            $region93: #{tpu_custom_call.1} parent=85 // pred_region
              %s430 = ssub.s32 256, 1
              loop: start=0, step=1, limit=1
              $region95: #{tpu_custom_call.1} parent=93 // loop_pre_header
                _
              $region96: #{tpu_custom_call.1} parent=93 // loop_header
                %s432 = sphi 0, %s436
                %p433 = scmp.ge.s32.totalorder %s432, 1
                %s437 = sphi %s422, %s422
                %s438 = sphi %s417, %s417
              $region97: #{tpu_custom_call.1} parent=93 // loop_header_branch
                %435 = sbr.rel (%p433) target = $region101
              $region98: #{tpu_custom_call.1} parent=93 // loop_body
                %v439 = vld [vmem:[%s437] sm:%s430]
                %440 = vst [vmem:[%s438] sm:%s430] %v439
                %v441 = vld [vmem:[%s437 + $0x10] sm:%s430]
                %442 = vst [vmem:[%s438 + $0x8] sm:%s430] %v441
                %v443 = vld [vmem:[%s437 + $0x20] sm:%s430]
                %444 = vst [vmem:[%s438 + $0x10] sm:%s430] %v443
                %v445 = vld [vmem:[%s437 + $0x30] sm:%s430]
                %446 = vst [vmem:[%s438 + $0x18] sm:%s430] %v445
                %v447 = vld [vmem:[%s437 + $0x40] sm:%s430]
                %448 = vst [vmem:[%s438 + $0x20] sm:%s430] %v447
                %v449 = vld [vmem:[%s437 + $0x50] sm:%s430]
                %450 = vst [vmem:[%s438 + $0x28] sm:%s430] %v449
                %v451 = vld [vmem:[%s437 + $0x60] sm:%s430]
                %452 = vst [vmem:[%s438 + $0x30] sm:%s430] %v451
                %v453 = vld [vmem:[%s437 + $0x70] sm:%s430]
                %454 = vst [vmem:[%s438 + $0x38] sm:%s430] %v453
              $region99: #{tpu_custom_call.1} parent=93 // loop_footer
                %s436 = sadd.s32 1, %s432
              $region100: #{tpu_custom_call.1} parent=93 // loop_footer_branch
                %431 = sbr.rel target = $region96
              $region101: #{tpu_custom_call.1} parent=93 // loop_exit
                _
            $region94: #{tpu_custom_call.1} parent=85 // pred_fallthru
              _
          $region86: #{tpu_custom_call.1} parent=81 // pred_fallthru
            _
          %483 = vnop
        $region82: #{tpu_custom_call.1} parent=35 // pred_fallthru
          _
        // Predicated region
        $region117: #{tpu_custom_call.1} parent=35 // pred_check
          %p484 = pneg %p182
        $region118: #{tpu_custom_call.1} parent=35 // pred_check_branch
          %486 = sbr.rel (%p484) target = $region120
        $region119: #{tpu_custom_call.1} parent=35 // pred_region
          %s487 = sand.u32 %s26, 1
          %s488 = scalar_lea.sflag [#allocation10], %s487
          %s489 = sand.u32 %s172, 1
          %s490 = smul.addr %s489, 8
          %s491 = scalar_lea.vmem [#allocation9], %s490
          %s493 = ssub.s32 128, 128
          %494 = vsyncadd %s488, %s493
          %s495 = smul.addr %s33, 128
          %s496 = scalar_lea.hbm %s6, %s495
          %s498 = sshll.u32 %s491, 4
          %s499 = int_to_ptr.vmem [resolvable:$true] %s498
          %501 = dma.hbm_to_vmem [thread:$0]  %s496, 128, %s499, %s488
        $region120: #{tpu_custom_call.1} parent=35 // pred_fallthru
          _
      $region36: #{tpu_custom_call.1} parent=5 // pred_fallthru
        _
      %p502 = scmp.le.s32.totalorder 1, %s26
      %p503 = scmp.lt.s32.totalorder %s26, 5
      %p504 = pnand %p502, %p503
      %p505 = pneg %p504
      // Predicated region
      $region121: #{tpu_custom_call.1} parent=5 // pred_check
        _
      $region122: #{tpu_custom_call.1} parent=5 // pred_check_branch
        %507 = sbr.rel (%p504) target = $region124
      $region123: #{tpu_custom_call.1} parent=5 // pred_region
        %s508 = ssub.s32 %s26, 1
        %s509 = sand.u32 %s53, 1
        %s510 = sand.u32 %s53, 1
        %s511 = smul.addr %s510, 64
        %s512 = scalar_lea.vmem [#allocation5], %s511
        // Predicated region
        $region125: #{tpu_custom_call.1} parent=123 // pred_check
          %p513 = pneg %p66
        $region126: #{tpu_custom_call.1} parent=123 // pred_check_branch
          %515 = sbr.rel (%p513) target = $region128
        $region127: #{tpu_custom_call.1} parent=123 // pred_region
          _
        $region128: #{tpu_custom_call.1} parent=123 // pred_fallthru
          _
        // Predicated region
        $region129: #{tpu_custom_call.1} parent=123 // pred_check
          %p516 = pneg %p87
        $region130: #{tpu_custom_call.1} parent=123 // pred_check_branch
          %518 = sbr.rel (%p516) target = $region132
        $region131: #{tpu_custom_call.1} parent=123 // pred_region
          %519 = dma.done [#allocation7], 512
        $region132: #{tpu_custom_call.1} parent=123 // pred_fallthru
          _
        %s520 = sand.u32 %s149, 1
        %s521 = sand.u32 %s149, 1
        %s522 = smul.addr %s521, 64
        %s523 = scalar_lea.vmem [#allocation8], %s522
        // Predicated region
        $region133: #{tpu_custom_call.1} parent=123 // pred_check
          %p524 = pneg %p162
        $region134: #{tpu_custom_call.1} parent=123 // pred_check_branch
          %526 = sbr.rel (%p524) target = $region136
        $region135: #{tpu_custom_call.1} parent=123 // pred_region
          _
        $region136: #{tpu_custom_call.1} parent=123 // pred_fallthru
          _
        %s527 = sand.u32 %s31, 1
        %s528 = scalar_lea.sflag [#allocation10], %s527
        %s529 = sand.u32 %s175, 1
        %s530 = smul.addr %s529, 8
        %s531 = scalar_lea.vmem [#allocation9], %s530
        // Predicated region
        $region137: #{tpu_custom_call.1} parent=123 // pred_check
          %p532 = pneg %p188
        $region138: #{tpu_custom_call.1} parent=123 // pred_check_branch
          %534 = sbr.rel (%p532) target = $region140
        $region139: #{tpu_custom_call.1} parent=123 // pred_region
          %535 = dma.done %s528, 128
        $region140: #{tpu_custom_call.1} parent=123 // pred_fallthru
          _
        // Predicated region
        $region141: #{tpu_custom_call.1} parent=123 // pred_check
          %p536 = pneg %p251
        $region142: #{tpu_custom_call.1} parent=123 // pred_check_branch
          %538 = sbr.rel (%p536) target = $region144
        $region143: #{tpu_custom_call.1} parent=123 // pred_region
          %539 = dma.done [#allocation10], 2048
        $region144: #{tpu_custom_call.1} parent=123 // pred_fallthru
          _
        %s540 = sand.u32 %s53, 1
        %s541 = sand.u32 %s53, 1
        %s542 = smul.addr %s541, 64
        %s543 = scalar_lea.vmem [#allocation5], %s542
        %p544 = pneg %p66
        %p545 = pneg %p63
        %p546 = pneg %p87
        %p547 = pneg %p84
        %p548 = pneg %p108
        %p549 = pneg %p105
        %p550 = scmp.lt.s32.totalorder %s35, 1
        %s551 = scalar_select %p550, %s35, 1
        %s552 = smul.addr %s551, 8
        %s553 = scalar_lea.vmem %s4, %s552
        %p554 = pneg %p134
        %p555 = pneg %p131
        %s556 = sand.u32 %s149, 1
        %s557 = sand.u32 %s149, 1
        %s558 = smul.addr %s557, 64
        %s559 = scalar_lea.vmem [#allocation8], %s558
        %p560 = pneg %p162
        %p561 = pneg %p159
        %s562 = sand.u32 %s31, 1
        %s563 = scalar_lea.sflag [#allocation10], %s562
        %s564 = sand.u32 %s175, 1
        %s565 = smul.addr %s564, 8
        %s566 = scalar_lea.vmem [#allocation9], %s565
        %p567 = pneg %p188
        %p568 = pneg %p185
        %p569 = pneg %p209
        %p570 = pneg %p206
        %p571 = pneg %p230
        %p572 = pneg %p227
        %p573 = pneg %p251
        %p574 = pneg %p248
        %p575 = pneg %p277
        %p576 = pneg %p274
        %p577 = scmp.lt.s32.totalorder %s35, 1
        %s578 = scalar_select %p577, %s35, 1
        %s579 = scalar_lea.vmem %s10, %s578
        %s580 = smul.u32 8, %s35
        %p581 = scmp.lt.s32.totalorder %s35, 1
        %s582 = scalar_select %p581, %s35, 1
        %s583 = smul.addr %s582, 8
        %s584 = scalar_lea.vmem %s4, %s583
        %s585 = smul.u32 8, %s35
        %p586 = scmp.lt.s32.totalorder %s35, 1
        %s587 = scalar_select %p586, %s35, 1
        %s588 = scalar_lea.vmem %s10, %s587
        %v589 = vld [vmem:[%s512] sm:$0xff]
        %v590 = vld [vmem:[%s512 + $0x8] sm:$0xff]
        %v591 = vld [vmem:[%s512 + $0x10] sm:$0xff]
        %v592 = vld [vmem:[%s512 + $0x18] sm:$0xff]
        %v593 = vld [vmem:[%s512 + $0x20] sm:$0xff]
        %v594 = vld [vmem:[%s512 + $0x28] sm:$0xff]
        %v595 = vld [vmem:[%s512 + $0x30] sm:$0xff]
        %v596 = vld [vmem:[%s512 + $0x38] sm:$0xff]
        %v597 = vld [vmem:[#allocation6] sm:$0xff]
        %v598 = vld [vmem:[#allocation6 + $0x8] sm:$0xff]
        %v599 = vld [vmem:[#allocation6 + $0x10] sm:$0xff]
        %v600 = vld [vmem:[#allocation6 + $0x18] sm:$0xff]
        %v601 = vld [vmem:[%s3] sm:$0x1]
        %v603 = vlaneseq
        %v604 = vshrl.u32 %v603, 7
        %v605 = vsub.s32 0, %v604
        %v606 = vrot.slane %v601, %v605
        %vm608 = vcmask 261120
        %v610 = vsel %vm608, %v589, 0
        %v613 = vsel %vm608, %v590, 0
        %v616 = vsel %vm608, %v591, 0
        %v619 = vsel %vm608, %v592, 0
        %v622 = vsel %vm608, %v593, 0
        %v625 = vsel %vm608, %v594, 0
        %v628 = vsel %vm608, %v595, 0
        %v631 = vsel %vm608, %v596, 0
        %633 = vmatprep.subr.mxu0 0.0
        %634 = vmatpush1.msra.mxu0 0.0
        %635 = vmatprep.subr.mxu0 0.0
        %636 = vmatpush1.msra.mxu0 0.0
        %637 = vmatprep.subr.mxu0 0.0
        %638 = vmatpush1.msra.mxu0 0.0
        %639 = vmatprep.subr.mxu0 0.0
        %640 = vmatpush1.msra.mxu0 0.0
        %641 = vmatprep.subr.mxu0 0.0
        %642 = vmatpush1.msra.mxu0 0.0
        %643 = vmatprep.subr.mxu0 0.0
        %644 = vmatpush1.msra.mxu0 0.0
        %645 = vmatprep.subr.mxu0 0.0
        %646 = vmatpush1.msra.mxu0 0.0
        %647 = vmatprep.subr.mxu0 0.0
        %648 = vmatpush1.msra.mxu0 0.0
        %649 = vmatprep.subr.mxu0 0.0
        %650 = vmatpush1.msra.mxu0 0.0
        %651 = vmatprep.subr.mxu0 0.0
        %652 = vmatpush1.msra.mxu0 0.0
        %653 = vmatprep.subr.mxu0 0.0
        %654 = vmatpush1.msra.mxu0 0.0
        %655 = vmatprep.subr.mxu0 0.0
        %656 = vmatpush1.msra.mxu0 0.0
        %657 = vmatprep.subr.mxu0 0.0
        %658 = vmatpush1.msra.mxu0 %v600
        %659 = vmatprep.subr.mxu0 0.0
        %660 = vmatpush1.msra.mxu0 %v599
        %661 = vmatprep.subr.mxu0 0.0
        %662 = vmatpush1.msra.mxu0 %v598
        %663 = vmatprep.subr.mxu0 0.0
        %664 = vmatpush1.msra.mxu0 %v597
        %665 = vmatprep.subr.mxu0 0.0
        %666 = vmatpush2.msra.mxu0 0.0
        %667 = vmatprep.subr.mxu0 0.0
        %668 = vmatpush2.msra.mxu0 0.0
        %669 = vmatprep.subr.mxu0 0.0
        %670 = vmatpush2.msra.mxu0 0.0
        %671 = vmatprep.subr.mxu0 0.0
        %672 = vmatpush2.msra.mxu0 0.0
        %673 = vmatprep.subr.mxu0 0.0
        %674 = vmatpush2.msra.mxu0 0.0
        %675 = vmatprep.subr.mxu0 0.0
        %676 = vmatpush2.msra.mxu0 0.0
        %677 = vmatprep.subr.mxu0 0.0
        %678 = vmatpush2.msra.mxu0 0.0
        %679 = vmatprep.subr.mxu0 0.0
        %680 = vmatpush2.msra.mxu0 0.0
        %681 = vmatprep.subr.mxu0 0.0
        %682 = vmatpush2.msra.mxu0 0.0
        %683 = vmatprep.subr.mxu0 0.0
        %684 = vmatpush2.msra.mxu0 0.0
        %685 = vmatprep.subr.mxu0 0.0
        %686 = vmatpush2.msra.mxu0 0.0
        %687 = vmatprep.subr.mxu0 0.0
        %688 = vmatpush2.msra.mxu0 0.0
        %689 = vmatprep.subr.mxu0 0.0
        %690 = vmatpush2.msra.mxu0 0.0
        %691 = vmatprep.subr.mxu0 0.0
        %692 = vmatpush2.msra.mxu0 0.0
        %693 = vmatprep.subr.mxu0 0.0
        %694 = vmatpush2.msra.mxu0 0.0
        %695 = vmatprep.subr.mxu0 0.0
        %696 = vmatpush2.msra.mxu0 0.0
        %697 = vmatprep.mubr.f32.mxu0 0.0
        %698 = vmatmul.mubr.f32.gmra.mxu0 %v610
        %v699 = vpop.f32.mrf.mxu0
        %v700 = vadd.f32 %v606, %v699
        %v701 = vpop.f32.mrf.mxu0
        %702 = vmatprep.mubr.f32.mxu0 0.0
        %703 = vmatmul.mubr.f32.gmra.mxu0 %v613
        %v704 = vpop.f32.mrf.mxu0
        %v705 = vadd.f32 %v606, %v704
        %v706 = vpop.f32.mrf.mxu0
        %707 = vmatprep.mubr.f32.mxu0 0.0
        %708 = vmatmul.mubr.f32.gmra.mxu0 %v616
        %v709 = vpop.f32.mrf.mxu0
        %v710 = vadd.f32 %v606, %v709
        %v711 = vpop.f32.mrf.mxu0
        %712 = vmatprep.mubr.f32.mxu0 0.0
        %713 = vmatmul.mubr.f32.gmra.mxu0 %v619
        %v714 = vpop.f32.mrf.mxu0
        %v715 = vadd.f32 %v606, %v714
        %v716 = vpop.f32.mrf.mxu0
        %717 = vmatprep.mubr.f32.mxu0 0.0
        %718 = vmatmul.mubr.f32.gmra.mxu0 %v622
        %v719 = vpop.f32.mrf.mxu0
        %v720 = vadd.f32 %v606, %v719
        %v721 = vpop.f32.mrf.mxu0
        %722 = vmatprep.mubr.f32.mxu0 0.0
        %723 = vmatmul.mubr.f32.gmra.mxu0 %v625
        %v724 = vpop.f32.mrf.mxu0
        %v725 = vadd.f32 %v606, %v724
        %v726 = vpop.f32.mrf.mxu0
        %727 = vmatprep.mubr.f32.mxu0 0.0
        %728 = vmatmul.mubr.f32.gmra.mxu0 %v628
        %v729 = vpop.f32.mrf.mxu0
        %v730 = vadd.f32 %v606, %v729
        %v731 = vpop.f32.mrf.mxu0
        %732 = vmatprep.mubr.f32.mxu0 0.0
        %733 = vmatmul.mubr.f32.gmra.mxu0 %v631
        %v734 = vpop.f32.mrf.mxu0
        %v735 = vadd.f32 %v606, %v734
        %v736 = vpop.f32.mrf.mxu0
        %737 = vdwg.mxu0
        %v738 = vlaneseq
        %v739 = vand.u32 %v738, 127
        %vm740 = vcmp.eq.s32.totalorder %v739, 127
        %v741 = vld [vmem:[%s523] sm:$0xff]
        %v742 = vld [vmem:[%s523 + $0x8] sm:$0xff]
        %v743 = vld [vmem:[%s523 + $0x10] sm:$0xff]
        %v744 = vld [vmem:[%s523 + $0x18] sm:$0xff]
        %v745 = vld [vmem:[%s523 + $0x20] sm:$0xff]
        %v746 = vld [vmem:[%s523 + $0x28] sm:$0xff]
        %v747 = vld [vmem:[%s523 + $0x30] sm:$0xff]
        %v748 = vld [vmem:[%s523 + $0x38] sm:$0xff]
        %750 = vset.pattern.permute.xlu0 0
        %751 = vperm.xlu0 %750, %v741
        %v752 = vpop.permute.xlu0 %751
        %755 = vset.pattern.permute.xlu0 0
        %756 = vperm.xlu0 %755, %v742
        %v757 = vpop.permute.xlu0 %756
        %760 = vset.pattern.permute.xlu0 0
        %761 = vperm.xlu0 %760, %v743
        %v762 = vpop.permute.xlu0 %761
        %765 = vset.pattern.permute.xlu0 0
        %766 = vperm.xlu0 %765, %v744
        %v767 = vpop.permute.xlu0 %766
        %770 = vset.pattern.permute.xlu0 0
        %771 = vperm.xlu0 %770, %v745
        %v772 = vpop.permute.xlu0 %771
        %775 = vset.pattern.permute.xlu0 0
        %776 = vperm.xlu0 %775, %v746
        %v777 = vpop.permute.xlu0 %776
        %780 = vset.pattern.permute.xlu0 0
        %781 = vperm.xlu0 %780, %v747
        %v782 = vpop.permute.xlu0 %781
        %785 = vset.pattern.permute.xlu0 0
        %786 = vperm.xlu0 %785, %v748
        %v787 = vpop.permute.xlu0 %786
        %v789 = vsel %vm740, %v752, %v700
        %v790 = vsel %vm740, %v757, %v705
        %v791 = vsel %vm740, %v762, %v710
        %v792 = vsel %vm740, %v767, %v715
        %v793 = vsel %vm740, %v772, %v720
        %v794 = vsel %vm740, %v777, %v725
        %v795 = vsel %vm740, %v782, %v730
        %v796 = vsel %vm740, %v787, %v735
        %s797 = smul.u32 %s36, 8
        %s798 = scalar_lea.vmem [#allocation2], %s797
        %799 = vst [vmem:[%s798] sm:$0xff] %v789
        %800 = vst [vmem:[%s798 + $0x10] sm:$0xff] %v790
        %801 = vst [vmem:[%s798 + $0x20] sm:$0xff] %v791
        %802 = vst [vmem:[%s798 + $0x30] sm:$0xff] %v792
        %803 = vst [vmem:[%s798 + $0x40] sm:$0xff] %v793
        %804 = vst [vmem:[%s798 + $0x50] sm:$0xff] %v794
        %805 = vst [vmem:[%s798 + $0x60] sm:$0xff] %v795
        %806 = vst [vmem:[%s798 + $0x70] sm:$0xff] %v796
        %p807 = scmp.eq.s32.totalorder %s36, 1
        // Predicated region
        $region145: #{tpu_custom_call.1} parent=123 // pred_check
          %p808 = pneg %p807
        $region146: #{tpu_custom_call.1} parent=123 // pred_check_branch
          %810 = sbr.rel (%p808) target = $region148
        $region147: #{tpu_custom_call.1} parent=123 // pred_region
          %v811 = vld [vmem:[#allocation2] sm:$0xff]
          %v812 = vld [vmem:[#allocation2 + $0x8] sm:$0xff]
          %v813 = vld [vmem:[#allocation2 + $0x10] sm:$0xff]
          %v814 = vld [vmem:[#allocation2 + $0x18] sm:$0xff]
          %v815 = vld [vmem:[#allocation2 + $0x20] sm:$0xff]
          %v816 = vld [vmem:[#allocation2 + $0x28] sm:$0xff]
          %v817 = vld [vmem:[#allocation2 + $0x30] sm:$0xff]
          %v818 = vld [vmem:[#allocation2 + $0x38] sm:$0xff]
          %v819 = vld [vmem:[#allocation2 + $0x40] sm:$0xff]
          %v820 = vld [vmem:[#allocation2 + $0x48] sm:$0xff]
          %v821 = vld [vmem:[#allocation2 + $0x50] sm:$0xff]
          %v822 = vld [vmem:[#allocation2 + $0x58] sm:$0xff]
          %v823 = vld [vmem:[#allocation2 + $0x60] sm:$0xff]
          %v824 = vld [vmem:[#allocation2 + $0x68] sm:$0xff]
          %v825 = vld [vmem:[#allocation2 + $0x70] sm:$0xff]
          %v826 = vld [vmem:[#allocation2 + $0x78] sm:$0xff]
          %v827 = vld [vmem:[%s584] sm:$0xff]
          %v828 = vld [vmem:[%s531] sm:$0xff]
          %v829 = vld [vmem:[%s7] sm:$0x1]
          %v830 = vld [vmem:[%s8] sm:$0x1]
          %v831 = vld [vmem:[#allocation11] sm:$0xff]
          %v832 = vld [vmem:[#allocation11 + $0x8] sm:$0xff]
          %v833 = vld [vmem:[#allocation11 + $0x10] sm:$0xff]
          %v834 = vld [vmem:[#allocation11 + $0x18] sm:$0xff]
          %v835 = vld [vmem:[#allocation11 + $0x20] sm:$0xff]
          %v836 = vld [vmem:[#allocation11 + $0x28] sm:$0xff]
          %v837 = vld [vmem:[#allocation11 + $0x30] sm:$0xff]
          %v838 = vld [vmem:[#allocation11 + $0x38] sm:$0xff]
          %v839 = vld [vmem:[#allocation11 + $0x40] sm:$0xff]
          %v840 = vld [vmem:[#allocation11 + $0x48] sm:$0xff]
          %v841 = vld [vmem:[#allocation11 + $0x50] sm:$0xff]
          %v842 = vld [vmem:[#allocation11 + $0x58] sm:$0xff]
          %v843 = vld [vmem:[#allocation11 + $0x60] sm:$0xff]
          %v844 = vld [vmem:[#allocation11 + $0x68] sm:$0xff]
          %v845 = vld [vmem:[#allocation11 + $0x70] sm:$0xff]
          %v846 = vld [vmem:[#allocation11 + $0x78] sm:$0xff]
          %v847 = vlaneseq
          %v848 = vshrl.u32 %v847, 7
          %v849 = vsub.s32 0, %v848
          %v850 = vrot.slane %v827, %v849
          %852 = vbcast.lane.b32.xlu0 %v850, 256
          %v853 = vpop.permute.xlu0 %852
          %s855 = sor.u32 256, 8
          %856 = vbcast.lane.b32.xlu0 %v850, %s855
          %v857 = vpop.permute.xlu0 %856
          %v858 = vlaneseq
          %v859 = vshrl.u32 %v858, 7
          %v860 = vsub.s32 1, %v859
          %v861 = vrot.slane %v827, %v860
          %863 = vbcast.lane.b32.xlu0 %v861, 256
          %v864 = vpop.permute.xlu0 %863
          %s866 = sor.u32 256, 8
          %867 = vbcast.lane.b32.xlu0 %v861, %s866
          %v868 = vpop.permute.xlu0 %867
          %v869 = vlaneseq
          %v870 = vshrl.u32 %v869, 7
          %v871 = vsub.s32 2, %v870
          %v872 = vrot.slane %v827, %v871
          %874 = vbcast.lane.b32.xlu0 %v872, 256
          %v875 = vpop.permute.xlu0 %874
          %s877 = sor.u32 256, 8
          %878 = vbcast.lane.b32.xlu0 %v872, %s877
          %v879 = vpop.permute.xlu0 %878
          %v880 = vlaneseq
          %v881 = vshrl.u32 %v880, 7
          %v882 = vsub.s32 3, %v881
          %v883 = vrot.slane %v827, %v882
          %885 = vbcast.lane.b32.xlu0 %v883, 256
          %v886 = vpop.permute.xlu0 %885
          %s888 = sor.u32 256, 8
          %889 = vbcast.lane.b32.xlu0 %v883, %s888
          %v890 = vpop.permute.xlu0 %889
          %v891 = vlaneseq
          %v892 = vshrl.u32 %v891, 7
          %v893 = vsub.s32 4, %v892
          %v894 = vrot.slane %v827, %v893
          %896 = vbcast.lane.b32.xlu0 %v894, 256
          %v897 = vpop.permute.xlu0 %896
          %s899 = sor.u32 256, 8
          %900 = vbcast.lane.b32.xlu0 %v894, %s899
          %v901 = vpop.permute.xlu0 %900
          %v902 = vlaneseq
          %v903 = vshrl.u32 %v902, 7
          %v904 = vsub.s32 5, %v903
          %v905 = vrot.slane %v827, %v904
          %907 = vbcast.lane.b32.xlu0 %v905, 256
          %v908 = vpop.permute.xlu0 %907
          %s910 = sor.u32 256, 8
          %911 = vbcast.lane.b32.xlu0 %v905, %s910
          %v912 = vpop.permute.xlu0 %911
          %v913 = vlaneseq
          %v914 = vshrl.u32 %v913, 7
          %v915 = vsub.s32 6, %v914
          %v916 = vrot.slane %v827, %v915
          %918 = vbcast.lane.b32.xlu0 %v916, 256
          %v919 = vpop.permute.xlu0 %918
          %s921 = sor.u32 256, 8
          %922 = vbcast.lane.b32.xlu0 %v916, %s921
          %v923 = vpop.permute.xlu0 %922
          %v924 = vlaneseq
          %v925 = vshrl.u32 %v924, 7
          %v926 = vsub.s32 7, %v925
          %v927 = vrot.slane %v827, %v926
          %929 = vbcast.lane.b32.xlu0 %v927, 256
          %v930 = vpop.permute.xlu0 %929
          %s932 = sor.u32 256, 8
          %933 = vbcast.lane.b32.xlu0 %v927, %s932
          %v934 = vpop.permute.xlu0 %933
          %vm935 = vcmp.eq.s32.totalorder %v739, %v853
          %vm936 = vcmp.eq.s32.totalorder %v739, %v857
          %vm937 = vcmp.eq.s32.totalorder %v739, %v864
          %vm938 = vcmp.eq.s32.totalorder %v739, %v868
          %vm939 = vcmp.eq.s32.totalorder %v739, %v875
          %vm940 = vcmp.eq.s32.totalorder %v739, %v879
          %vm941 = vcmp.eq.s32.totalorder %v739, %v886
          %vm942 = vcmp.eq.s32.totalorder %v739, %v890
          %vm943 = vcmp.eq.s32.totalorder %v739, %v897
          %vm944 = vcmp.eq.s32.totalorder %v739, %v901
          %vm945 = vcmp.eq.s32.totalorder %v739, %v908
          %vm946 = vcmp.eq.s32.totalorder %v739, %v912
          %vm947 = vcmp.eq.s32.totalorder %v739, %v919
          %vm948 = vcmp.eq.s32.totalorder %v739, %v923
          %vm949 = vcmp.eq.s32.totalorder %v739, %v930
          %vm950 = vcmp.eq.s32.totalorder %v739, %v934
          %v951 = vsel %vm935, 1, 0
          %v952 = vsel %vm936, 1, 0
          %v953 = vsel %vm937, 1, 0
          %v954 = vsel %vm938, 1, 0
          %v955 = vsel %vm939, 1, 0
          %v956 = vsel %vm940, 1, 0
          %v957 = vsel %vm941, 1, 0
          %v958 = vsel %vm942, 1, 0
          %v959 = vsel %vm943, 1, 0
          %v960 = vsel %vm944, 1, 0
          %v961 = vsel %vm945, 1, 0
          %v962 = vsel %vm946, 1, 0
          %v963 = vsel %vm947, 1, 0
          %v964 = vsel %vm948, 1, 0
          %v965 = vsel %vm949, 1, 0
          %v966 = vsel %vm950, 1, 0
          %v967 = vcvt.s32.f32 %v951
          %v968 = vcvt.s32.f32 %v952
          %v969 = vcvt.s32.f32 %v953
          %v970 = vcvt.s32.f32 %v954
          %v971 = vcvt.s32.f32 %v955
          %v972 = vcvt.s32.f32 %v956
          %v973 = vcvt.s32.f32 %v957
          %v974 = vcvt.s32.f32 %v958
          %v975 = vcvt.s32.f32 %v959
          %v976 = vcvt.s32.f32 %v960
          %v977 = vcvt.s32.f32 %v961
          %v978 = vcvt.s32.f32 %v962
          %v979 = vcvt.s32.f32 %v963
          %v980 = vcvt.s32.f32 %v964
          %v981 = vcvt.s32.f32 %v965
          %v982 = vcvt.s32.f32 %v966
          %v983 = vmul.f32 %v811, %v967
          %v984 = vmul.f32 %v812, %v968
          %v985 = vmul.f32 %v813, %v969
          %v986 = vmul.f32 %v814, %v970
          %v987 = vmul.f32 %v815, %v971
          %v988 = vmul.f32 %v816, %v972
          %v989 = vmul.f32 %v817, %v973
          %v990 = vmul.f32 %v818, %v974
          %v991 = vmul.f32 %v819, %v975
          %v992 = vmul.f32 %v820, %v976
          %v993 = vmul.f32 %v821, %v977
          %v994 = vmul.f32 %v822, %v978
          %v995 = vmul.f32 %v823, %v979
          %v996 = vmul.f32 %v824, %v980
          %v997 = vmul.f32 %v825, %v981
          %v998 = vmul.f32 %v826, %v982
          %999 = vadd.xlane.f32.xlu0 %v983
          %v1000 = vpop.xlane.xlu0 %999
          %1001 = vadd.xlane.f32.xlu0 %v984
          %v1002 = vpop.xlane.xlu0 %1001
          %1003 = vadd.xlane.f32.xlu0 %v985
          %v1004 = vpop.xlane.xlu0 %1003
          %1005 = vadd.xlane.f32.xlu0 %v986
          %v1006 = vpop.xlane.xlu0 %1005
          %1007 = vadd.xlane.f32.xlu0 %v987
          %v1008 = vpop.xlane.xlu0 %1007
          %1009 = vadd.xlane.f32.xlu0 %v988
          %v1010 = vpop.xlane.xlu0 %1009
          %1011 = vadd.xlane.f32.xlu0 %v989
          %v1012 = vpop.xlane.xlu0 %1011
          %1013 = vadd.xlane.f32.xlu0 %v990
          %v1014 = vpop.xlane.xlu0 %1013
          %1015 = vadd.xlane.f32.xlu0 %v991
          %v1016 = vpop.xlane.xlu0 %1015
          %1017 = vadd.xlane.f32.xlu0 %v992
          %v1018 = vpop.xlane.xlu0 %1017
          %1019 = vadd.xlane.f32.xlu0 %v993
          %v1020 = vpop.xlane.xlu0 %1019
          %1021 = vadd.xlane.f32.xlu0 %v994
          %v1022 = vpop.xlane.xlu0 %1021
          %1023 = vadd.xlane.f32.xlu0 %v995
          %v1024 = vpop.xlane.xlu0 %1023
          %1025 = vadd.xlane.f32.xlu0 %v996
          %v1026 = vpop.xlane.xlu0 %1025
          %1027 = vadd.xlane.f32.xlu0 %v997
          %v1028 = vpop.xlane.xlu0 %1027
          %1029 = vadd.xlane.f32.xlu0 %v998
          %v1030 = vpop.xlane.xlu0 %1029
          %v1047 = vlaneseq
          %v1048 = vshrl.u32 %v1047, 7
          %v1049 = vsub.s32 %v739, %v1048
          %v1050 = vrot.slane %v1000, %v1049
          %v1051 = vadd.s32 %v739, 4294967288
          %v1052 = vlaneseq
          %v1053 = vshrl.u32 %v1052, 7
          %v1054 = vsub.s32 %v1051, %v1053
          %v1055 = vrot.slane %v1002, %v1054
          %vm1056 = vcmask 130112
          %v1057 = vsel %vm1056, %v1055, %v1050
          %v1058 = vlaneseq
          %v1059 = vshrl.u32 %v1058, 7
          %v1060 = vsub.s32 %v739, %v1059
          %v1061 = vrot.slane %v1004, %v1060
          %v1062 = vlaneseq
          %v1063 = vshrl.u32 %v1062, 7
          %v1064 = vsub.s32 %v1051, %v1063
          %v1065 = vrot.slane %v1006, %v1064
          %v1066 = vsel %vm1056, %v1065, %v1061
          %v1067 = vlaneseq
          %v1068 = vshrl.u32 %v1067, 7
          %v1069 = vsub.s32 %v739, %v1068
          %v1070 = vrot.slane %v1008, %v1069
          %v1071 = vlaneseq
          %v1072 = vshrl.u32 %v1071, 7
          %v1073 = vsub.s32 %v1051, %v1072
          %v1074 = vrot.slane %v1010, %v1073
          %v1075 = vsel %vm1056, %v1074, %v1070
          %v1076 = vlaneseq
          %v1077 = vshrl.u32 %v1076, 7
          %v1078 = vsub.s32 %v739, %v1077
          %v1079 = vrot.slane %v1012, %v1078
          %v1080 = vlaneseq
          %v1081 = vshrl.u32 %v1080, 7
          %v1082 = vsub.s32 %v1051, %v1081
          %v1083 = vrot.slane %v1014, %v1082
          %v1084 = vsel %vm1056, %v1083, %v1079
          %v1085 = vlaneseq
          %v1086 = vshrl.u32 %v1085, 7
          %v1087 = vsub.s32 %v739, %v1086
          %v1088 = vrot.slane %v1016, %v1087
          %v1089 = vlaneseq
          %v1090 = vshrl.u32 %v1089, 7
          %v1091 = vsub.s32 %v1051, %v1090
          %v1092 = vrot.slane %v1018, %v1091
          %v1093 = vsel %vm1056, %v1092, %v1088
          %v1094 = vlaneseq
          %v1095 = vshrl.u32 %v1094, 7
          %v1096 = vsub.s32 %v739, %v1095
          %v1097 = vrot.slane %v1020, %v1096
          %v1098 = vlaneseq
          %v1099 = vshrl.u32 %v1098, 7
          %v1100 = vsub.s32 %v1051, %v1099
          %v1101 = vrot.slane %v1022, %v1100
          %v1102 = vsel %vm1056, %v1101, %v1097
          %v1103 = vlaneseq
          %v1104 = vshrl.u32 %v1103, 7
          %v1105 = vsub.s32 %v739, %v1104
          %v1106 = vrot.slane %v1024, %v1105
          %v1107 = vlaneseq
          %v1108 = vshrl.u32 %v1107, 7
          %v1109 = vsub.s32 %v1051, %v1108
          %v1110 = vrot.slane %v1026, %v1109
          %v1111 = vsel %vm1056, %v1110, %v1106
          %v1112 = vlaneseq
          %v1113 = vshrl.u32 %v1112, 7
          %v1114 = vsub.s32 %v739, %v1113
          %v1115 = vrot.slane %v1028, %v1114
          %v1116 = vlaneseq
          %v1117 = vshrl.u32 %v1116, 7
          %v1118 = vsub.s32 %v1051, %v1117
          %v1119 = vrot.slane %v1030, %v1118
          %v1120 = vsel %vm1056, %v1119, %v1115
          %vm1121 = vcmask 1041409
          %v1122 = vsel %vm1121, %v1066, %v1057
          %vm1123 = vcmask 1042434
          %v1124 = vsel %vm1123, %v1075, %v1122
          %vm1125 = vcmask 1043459
          %v1126 = vsel %vm1125, %v1084, %v1124
          %vm1127 = vcmask 1044484
          %v1128 = vsel %vm1127, %v1093, %v1126
          %vm1129 = vcmask 1045509
          %v1130 = vsel %vm1129, %v1102, %v1128
          %vm1131 = vcmask 1046534
          %v1132 = vsel %vm1131, %v1111, %v1130
          %vm1133 = vcmask 1047559
          %v1134 = vsel %vm1133, %v1120, %v1132
          %v1136 = vmul.f32 %v828, %v1134
          %vm1137 = vcmask 130048
          %v1138 = vsel %vm1137, %v1136, 0.0
          %1139 = vadd.xlane.f32.xlu0 %v1138
          %v1140 = vpop.xlane.xlu0 %1139
          %v1142 = vlaneseq
          %v1143 = vshrl.u32 %v1142, 7
          %v1144 = vsub.s32 0, %v1143
          %v1145 = vrot.slane %v829, %v1144
          %v1147 = vmul.f32 %v967, %v1145
          %v1148 = vmul.f32 %v969, %v1145
          %v1149 = vmul.f32 %v971, %v1145
          %v1150 = vmul.f32 %v973, %v1145
          %v1151 = vmul.f32 %v975, %v1145
          %v1152 = vmul.f32 %v977, %v1145
          %v1153 = vmul.f32 %v979, %v1145
          %v1154 = vmul.f32 %v981, %v1145
          %v1163 = vrot.slane %v1148, 7
          %v1164 = vsel %vm1121, %v1163, %v1147
          %v1165 = vrot.slane %v1149, 6
          %v1166 = vsel %vm1123, %v1165, %v1164
          %v1167 = vrot.slane %v1150, 5
          %v1168 = vsel %vm1125, %v1167, %v1166
          %v1169 = vrot.slane %v1151, 4
          %v1170 = vsel %vm1127, %v1169, %v1168
          %v1171 = vrot.slane %v1152, 3
          %v1172 = vsel %vm1129, %v1171, %v1170
          %v1173 = vrot.slane %v1153, 2
          %v1174 = vsel %vm1131, %v1173, %v1172
          %v1175 = vrot.slane %v1154, 1
          %v1176 = vsel %vm1133, %v1175, %v1174
          %1178 = vadd.xlane.f32.xlu0 %v1176
          %v1179 = vpop.xlane.xlu0 %1178
          %v1180 = vadd.f32 %v1140, %v1179
          %1181 = vmatprep.subr.mxu0 0.0
          %1182 = vmatpush1.msra.mxu0 %v846
          %1183 = vmatprep.subr.mxu0 0.0
          %1184 = vmatpush1.msra.mxu0 %v845
          %1185 = vmatprep.subr.mxu0 0.0
          %1186 = vmatpush1.msra.mxu0 %v844
          %1187 = vmatprep.subr.mxu0 0.0
          %1188 = vmatpush1.msra.mxu0 %v843
          %1189 = vmatprep.subr.mxu0 0.0
          %1190 = vmatpush1.msra.mxu0 %v842
          %1191 = vmatprep.subr.mxu0 0.0
          %1192 = vmatpush1.msra.mxu0 %v841
          %1193 = vmatprep.subr.mxu0 0.0
          %1194 = vmatpush1.msra.mxu0 %v840
          %1195 = vmatprep.subr.mxu0 0.0
          %1196 = vmatpush1.msra.mxu0 %v839
          %1197 = vmatprep.subr.mxu0 0.0
          %1198 = vmatpush1.msra.mxu0 %v838
          %1199 = vmatprep.subr.mxu0 0.0
          %1200 = vmatpush1.msra.mxu0 %v837
          %1201 = vmatprep.subr.mxu0 0.0
          %1202 = vmatpush1.msra.mxu0 %v836
          %1203 = vmatprep.subr.mxu0 0.0
          %1204 = vmatpush1.msra.mxu0 %v835
          %1205 = vmatprep.subr.mxu0 0.0
          %1206 = vmatpush1.msra.mxu0 %v834
          %1207 = vmatprep.subr.mxu0 0.0
          %1208 = vmatpush1.msra.mxu0 %v833
          %1209 = vmatprep.subr.mxu0 0.0
          %1210 = vmatpush1.msra.mxu0 %v832
          %1211 = vmatprep.subr.mxu0 0.0
          %1212 = vmatpush1.msra.mxu0 %v831
          %1213 = vmatprep.subr.mxu0 0.0
          %1214 = vmatpush2.msra.mxu0 0.0
          %1215 = vmatprep.subr.mxu0 0.0
          %1216 = vmatpush2.msra.mxu0 0.0
          %1217 = vmatprep.subr.mxu0 0.0
          %1218 = vmatpush2.msra.mxu0 0.0
          %1219 = vmatprep.subr.mxu0 0.0
          %1220 = vmatpush2.msra.mxu0 0.0
          %1221 = vmatprep.subr.mxu0 0.0
          %1222 = vmatpush2.msra.mxu0 0.0
          %1223 = vmatprep.subr.mxu0 0.0
          %1224 = vmatpush2.msra.mxu0 0.0
          %1225 = vmatprep.subr.mxu0 0.0
          %1226 = vmatpush2.msra.mxu0 0.0
          %1227 = vmatprep.subr.mxu0 0.0
          %1228 = vmatpush2.msra.mxu0 0.0
          %1229 = vmatprep.subr.mxu0 0.0
          %1230 = vmatpush2.msra.mxu0 0.0
          %1231 = vmatprep.subr.mxu0 0.0
          %1232 = vmatpush2.msra.mxu0 0.0
          %1233 = vmatprep.subr.mxu0 0.0
          %1234 = vmatpush2.msra.mxu0 0.0
          %1235 = vmatprep.subr.mxu0 0.0
          %1236 = vmatpush2.msra.mxu0 0.0
          %1237 = vmatprep.subr.mxu0 0.0
          %1238 = vmatpush2.msra.mxu0 0.0
          %1239 = vmatprep.subr.mxu0 0.0
          %1240 = vmatpush2.msra.mxu0 0.0
          %1241 = vmatprep.subr.mxu0 0.0
          %1242 = vmatpush2.msra.mxu0 0.0
          %1243 = vmatprep.subr.mxu0 0.0
          %1244 = vmatpush2.msra.mxu0 0.0
          %1245 = vmatprep.mubr.f32.mxu0 0.0
          %1246 = vmatmul.mubr.f32.gmra.mxu0 %v967
          %v1247 = vpop.f32.mrf.mxu0
          %v1248 = vadd.f32 0.0, %v1247
          %v1249 = vpop.f32.mrf.mxu0
          %1250 = vmatprep.mubr.f32.mxu0 0.0
          %1251 = vmatmul.mubr.f32.gmra.mxu0 %v968
          %v1252 = vpop.f32.mrf.mxu0
          %v1253 = vadd.f32 0.0, %v1252
          %v1254 = vpop.f32.mrf.mxu0
          %1255 = vmatprep.mubr.f32.mxu0 0.0
          %1256 = vmatmul.mubr.f32.gmra.mxu0 %v969
          %v1257 = vpop.f32.mrf.mxu0
          %v1258 = vadd.f32 0.0, %v1257
          %v1259 = vpop.f32.mrf.mxu0
          %1260 = vmatprep.mubr.f32.mxu0 0.0
          %1261 = vmatmul.mubr.f32.gmra.mxu0 %v970
          %v1262 = vpop.f32.mrf.mxu0
          %v1263 = vadd.f32 0.0, %v1262
          %v1264 = vpop.f32.mrf.mxu0
          %1265 = vmatprep.mubr.f32.mxu0 0.0
          %1266 = vmatmul.mubr.f32.gmra.mxu0 %v971
          %v1267 = vpop.f32.mrf.mxu0
          %v1268 = vadd.f32 0.0, %v1267
          %v1269 = vpop.f32.mrf.mxu0
          %1270 = vmatprep.mubr.f32.mxu0 0.0
          %1271 = vmatmul.mubr.f32.gmra.mxu0 %v972
          %v1272 = vpop.f32.mrf.mxu0
          %v1273 = vadd.f32 0.0, %v1272
          %v1274 = vpop.f32.mrf.mxu0
          %1275 = vmatprep.mubr.f32.mxu0 0.0
          %1276 = vmatmul.mubr.f32.gmra.mxu0 %v973
          %v1277 = vpop.f32.mrf.mxu0
          %v1278 = vadd.f32 0.0, %v1277
          %v1279 = vpop.f32.mrf.mxu0
          %1280 = vmatprep.mubr.f32.mxu0 0.0
          %1281 = vmatmul.mubr.f32.gmra.mxu0 %v974
          %v1282 = vpop.f32.mrf.mxu0
          %v1283 = vadd.f32 0.0, %v1282
          %v1284 = vpop.f32.mrf.mxu0
          %1285 = vmatprep.mubr.f32.mxu0 0.0
          %1286 = vmatmul.mubr.f32.gmra.mxu0 %v975
          %v1287 = vpop.f32.mrf.mxu0
          %v1288 = vadd.f32 0.0, %v1287
          %v1289 = vpop.f32.mrf.mxu0
          %1290 = vmatprep.mubr.f32.mxu0 0.0
          %1291 = vmatmul.mubr.f32.gmra.mxu0 %v976
          %v1292 = vpop.f32.mrf.mxu0
          %v1293 = vadd.f32 0.0, %v1292
          %v1294 = vpop.f32.mrf.mxu0
          %1295 = vmatprep.mubr.f32.mxu0 0.0
          %1296 = vmatmul.mubr.f32.gmra.mxu0 %v977
          %v1297 = vpop.f32.mrf.mxu0
          %v1298 = vadd.f32 0.0, %v1297
          %v1299 = vpop.f32.mrf.mxu0
          %1300 = vmatprep.mubr.f32.mxu0 0.0
          %1301 = vmatmul.mubr.f32.gmra.mxu0 %v978
          %v1302 = vpop.f32.mrf.mxu0
          %v1303 = vadd.f32 0.0, %v1302
          %v1304 = vpop.f32.mrf.mxu0
          %1305 = vmatprep.mubr.f32.mxu0 0.0
          %1306 = vmatmul.mubr.f32.gmra.mxu0 %v979
          %v1307 = vpop.f32.mrf.mxu0
          %v1308 = vadd.f32 0.0, %v1307
          %v1309 = vpop.f32.mrf.mxu0
          %1310 = vmatprep.mubr.f32.mxu0 0.0
          %1311 = vmatmul.mubr.f32.gmra.mxu0 %v980
          %v1312 = vpop.f32.mrf.mxu0
          %v1313 = vadd.f32 0.0, %v1312
          %v1314 = vpop.f32.mrf.mxu0
          %1315 = vmatprep.mubr.f32.mxu0 0.0
          %1316 = vmatmul.mubr.f32.gmra.mxu0 %v981
          %v1317 = vpop.f32.mrf.mxu0
          %v1318 = vadd.f32 0.0, %v1317
          %v1319 = vpop.f32.mrf.mxu0
          %1320 = vmatprep.mubr.f32.mxu0 0.0
          %1321 = vmatmul.mubr.f32.gmra.mxu0 %v982
          %v1322 = vpop.f32.mrf.mxu0
          %v1323 = vadd.f32 0.0, %v1322
          %v1324 = vpop.f32.mrf.mxu0
          %1325 = vdwg.mxu0
          %vm1342 = vcmask 1046528
          %v1343 = vrot.slane %v967, 1
          %v1344 = vrot.slane %v968, 1
          %v1345 = vsel %vm1342, %v1343, %v1344
          %v1346 = vrot.slane %v969, 1
          %v1347 = vrot.slane %v970, 1
          %v1348 = vsel %vm1342, %v1346, %v1347
          %v1349 = vrot.slane %v971, 1
          %v1350 = vrot.slane %v972, 1
          %v1351 = vsel %vm1342, %v1349, %v1350
          %v1352 = vrot.slane %v973, 1
          %v1353 = vrot.slane %v974, 1
          %v1354 = vsel %vm1342, %v1352, %v1353
          %v1355 = vrot.slane %v975, 1
          %v1356 = vrot.slane %v976, 1
          %v1357 = vsel %vm1342, %v1355, %v1356
          %v1358 = vrot.slane %v977, 1
          %v1359 = vrot.slane %v978, 1
          %v1360 = vsel %vm1342, %v1358, %v1359
          %v1361 = vrot.slane %v979, 1
          %v1362 = vrot.slane %v980, 1
          %v1363 = vsel %vm1342, %v1361, %v1362
          %v1364 = vrot.slane %v981, 1
          %v1365 = vrot.slane %v982, 1
          %v1366 = vsel %vm1342, %v1364, %v1365
          %v1383 = vmul.f32 %v1248, %v1345
          %v1384 = vmul.f32 %v1253, %v1344
          %v1385 = vmul.f32 %v1258, %v1348
          %v1386 = vmul.f32 %v1263, %v1347
          %v1387 = vmul.f32 %v1268, %v1351
          %v1388 = vmul.f32 %v1273, %v1350
          %v1389 = vmul.f32 %v1278, %v1354
          %v1390 = vmul.f32 %v1283, %v1353
          %v1391 = vmul.f32 %v1288, %v1357
          %v1392 = vmul.f32 %v1293, %v1356
          %v1393 = vmul.f32 %v1298, %v1360
          %v1394 = vmul.f32 %v1303, %v1359
          %v1395 = vmul.f32 %v1308, %v1363
          %v1396 = vmul.f32 %v1313, %v1362
          %v1397 = vmul.f32 %v1318, %v1366
          %v1398 = vmul.f32 %v1323, %v1365
          %1399 = vadd.xlane.f32.xlu0 %v1383
          %v1400 = vpop.xlane.xlu0 %1399
          %v1401 = vsel %vm1342, %v1384, 0.0
          %1402 = vadd.xlane.f32.xlu0 %v1401
          %v1403 = vpop.xlane.xlu0 %1402
          %1404 = vadd.xlane.f32.xlu0 %v1385
          %v1405 = vpop.xlane.xlu0 %1404
          %v1406 = vsel %vm1342, %v1386, 0.0
          %1407 = vadd.xlane.f32.xlu0 %v1406
          %v1408 = vpop.xlane.xlu0 %1407
          %1409 = vadd.xlane.f32.xlu0 %v1387
          %v1410 = vpop.xlane.xlu0 %1409
          %v1411 = vsel %vm1342, %v1388, 0.0
          %1412 = vadd.xlane.f32.xlu0 %v1411
          %v1413 = vpop.xlane.xlu0 %1412
          %1414 = vadd.xlane.f32.xlu0 %v1389
          %v1415 = vpop.xlane.xlu0 %1414
          %v1416 = vsel %vm1342, %v1390, 0.0
          %1417 = vadd.xlane.f32.xlu0 %v1416
          %v1418 = vpop.xlane.xlu0 %1417
          %1419 = vadd.xlane.f32.xlu0 %v1391
          %v1420 = vpop.xlane.xlu0 %1419
          %v1421 = vsel %vm1342, %v1392, 0.0
          %1422 = vadd.xlane.f32.xlu0 %v1421
          %v1423 = vpop.xlane.xlu0 %1422
          %1424 = vadd.xlane.f32.xlu0 %v1393
          %v1425 = vpop.xlane.xlu0 %1424
          %v1426 = vsel %vm1342, %v1394, 0.0
          %1427 = vadd.xlane.f32.xlu0 %v1426
          %v1428 = vpop.xlane.xlu0 %1427
          %1429 = vadd.xlane.f32.xlu0 %v1395
          %v1430 = vpop.xlane.xlu0 %1429
          %v1431 = vsel %vm1342, %v1396, 0.0
          %1432 = vadd.xlane.f32.xlu0 %v1431
          %v1433 = vpop.xlane.xlu0 %1432
          %1434 = vadd.xlane.f32.xlu0 %v1397
          %v1435 = vpop.xlane.xlu0 %1434
          %v1436 = vsel %vm1342, %v1398, 0.0
          %1437 = vadd.xlane.f32.xlu0 %v1436
          %v1438 = vpop.xlane.xlu0 %1437
          %v1455 = vadd.s32 %v739, 4294967295
          %v1456 = vlaneseq
          %v1457 = vshrl.u32 %v1456, 7
          %v1458 = vsub.s32 %v1455, %v1457
          %v1459 = vrot.slane %v1400, %v1458
          %v1460 = vadd.s32 %v739, 4294967287
          %v1461 = vlaneseq
          %v1462 = vshrl.u32 %v1461, 7
          %v1463 = vsub.s32 %v1460, %v1462
          %v1464 = vrot.slane %v1403, %v1463
          %vm1465 = vcmask 138312
          %v1466 = vsel %vm1465, %v1464, %v1459
          %v1467 = vlaneseq
          %v1468 = vshrl.u32 %v1467, 7
          %v1469 = vsub.s32 %v1455, %v1468
          %v1470 = vrot.slane %v1405, %v1469
          %v1471 = vlaneseq
          %v1472 = vshrl.u32 %v1471, 7
          %v1473 = vsub.s32 %v1460, %v1472
          %v1474 = vrot.slane %v1408, %v1473
          %v1475 = vsel %vm1465, %v1474, %v1470
          %v1476 = vlaneseq
          %v1477 = vshrl.u32 %v1476, 7
          %v1478 = vsub.s32 %v1455, %v1477
          %v1479 = vrot.slane %v1410, %v1478
          %v1480 = vlaneseq
          %v1481 = vshrl.u32 %v1480, 7
          %v1482 = vsub.s32 %v1460, %v1481
          %v1483 = vrot.slane %v1413, %v1482
          %v1484 = vsel %vm1465, %v1483, %v1479
          %v1485 = vlaneseq
          %v1486 = vshrl.u32 %v1485, 7
          %v1487 = vsub.s32 %v1455, %v1486
          %v1488 = vrot.slane %v1415, %v1487
          %v1489 = vlaneseq
          %v1490 = vshrl.u32 %v1489, 7
          %v1491 = vsub.s32 %v1460, %v1490
          %v1492 = vrot.slane %v1418, %v1491
          %v1493 = vsel %vm1465, %v1492, %v1488
          %v1494 = vlaneseq
          %v1495 = vshrl.u32 %v1494, 7
          %v1496 = vsub.s32 %v1455, %v1495
          %v1497 = vrot.slane %v1420, %v1496
          %v1498 = vlaneseq
          %v1499 = vshrl.u32 %v1498, 7
          %v1500 = vsub.s32 %v1460, %v1499
          %v1501 = vrot.slane %v1423, %v1500
          %v1502 = vsel %vm1465, %v1501, %v1497
          %v1503 = vlaneseq
          %v1504 = vshrl.u32 %v1503, 7
          %v1505 = vsub.s32 %v1455, %v1504
          %v1506 = vrot.slane %v1425, %v1505
          %v1507 = vlaneseq
          %v1508 = vshrl.u32 %v1507, 7
          %v1509 = vsub.s32 %v1460, %v1508
          %v1510 = vrot.slane %v1428, %v1509
          %v1511 = vsel %vm1465, %v1510, %v1506
          %v1512 = vlaneseq
          %v1513 = vshrl.u32 %v1512, 7
          %v1514 = vsub.s32 %v1455, %v1513
          %v1515 = vrot.slane %v1430, %v1514
          %v1516 = vlaneseq
          %v1517 = vshrl.u32 %v1516, 7
          %v1518 = vsub.s32 %v1460, %v1517
          %v1519 = vrot.slane %v1433, %v1518
          %v1520 = vsel %vm1465, %v1519, %v1515
          %v1521 = vlaneseq
          %v1522 = vshrl.u32 %v1521, 7
          %v1523 = vsub.s32 %v1455, %v1522
          %v1524 = vrot.slane %v1435, %v1523
          %v1525 = vlaneseq
          %v1526 = vshrl.u32 %v1525, 7
          %v1527 = vsub.s32 %v1460, %v1526
          %v1528 = vrot.slane %v1438, %v1527
          %v1529 = vsel %vm1465, %v1528, %v1524
          %v1530 = vsel %vm1121, %v1475, %v1466
          %v1531 = vsel %vm1123, %v1484, %v1530
          %v1532 = vsel %vm1125, %v1493, %v1531
          %v1533 = vsel %vm1127, %v1502, %v1532
          %v1534 = vsel %vm1129, %v1511, %v1533
          %v1535 = vsel %vm1131, %v1520, %v1534
          %v1536 = vsel %vm1133, %v1529, %v1535
          %v1538 = vmul.f32 %v828, %v1536
          %1540 = vrot.lane.b32.xlu0 %v1538, 127
          %v1541 = vpop.permute.xlu0 %1540
          %vm1543 = vcmask 121856
          %v1544 = vsel %vm1543, %v1541, 0.0
          %1545 = vadd.xlane.f32.xlu0 %v1544
          %v1546 = vpop.xlane.xlu0 %1545
          %v1547 = vadd.f32 %v1180, %v1546
          %v1548 = vsel %vm1137, %v828, 0.0
          %1549 = vadd.xlane.f32.xlu0 %v1548
          %v1550 = vpop.xlane.xlu0 %1549
          %v1551 = vcvt.f32.s32.to.zero.pseudo %v1550
          %v1552 = vsub.s32 %v1551, 1
          %vm1553 = vcmp.eq.s32.totalorder %v739, %v1552
          %v1554 = vsel %vm1553, 1, 0
          %v1555 = vcvt.s32.f32 %v1554
          %v1556 = vlaneseq
          %v1557 = vshrl.u32 %v1556, 7
          %v1558 = vsub.s32 0, %v1557
          %v1559 = vrot.slane %v1555, %v1558
          %1561 = vbcast.lane.b32.xlu0 %v1559, 256
          %v1562 = vpop.permute.xlu0 %1561
          %s1564 = sor.u32 256, 8
          %1565 = vbcast.lane.b32.xlu0 %v1559, %s1564
          %v1566 = vpop.permute.xlu0 %1565
          %v1567 = vlaneseq
          %v1568 = vshrl.u32 %v1567, 7
          %v1569 = vsub.s32 1, %v1568
          %v1570 = vrot.slane %v1555, %v1569
          %1572 = vbcast.lane.b32.xlu0 %v1570, 256
          %v1573 = vpop.permute.xlu0 %1572
          %s1575 = sor.u32 256, 8
          %1576 = vbcast.lane.b32.xlu0 %v1570, %s1575
          %v1577 = vpop.permute.xlu0 %1576
          %v1578 = vlaneseq
          %v1579 = vshrl.u32 %v1578, 7
          %v1580 = vsub.s32 2, %v1579
          %v1581 = vrot.slane %v1555, %v1580
          %1583 = vbcast.lane.b32.xlu0 %v1581, 256
          %v1584 = vpop.permute.xlu0 %1583
          %s1586 = sor.u32 256, 8
          %1587 = vbcast.lane.b32.xlu0 %v1581, %s1586
          %v1588 = vpop.permute.xlu0 %1587
          %v1589 = vlaneseq
          %v1590 = vshrl.u32 %v1589, 7
          %v1591 = vsub.s32 3, %v1590
          %v1592 = vrot.slane %v1555, %v1591
          %1594 = vbcast.lane.b32.xlu0 %v1592, 256
          %v1595 = vpop.permute.xlu0 %1594
          %s1597 = sor.u32 256, 8
          %1598 = vbcast.lane.b32.xlu0 %v1592, %s1597
          %v1599 = vpop.permute.xlu0 %1598
          %v1600 = vlaneseq
          %v1601 = vshrl.u32 %v1600, 7
          %v1602 = vsub.s32 4, %v1601
          %v1603 = vrot.slane %v1555, %v1602
          %1605 = vbcast.lane.b32.xlu0 %v1603, 256
          %v1606 = vpop.permute.xlu0 %1605
          %s1608 = sor.u32 256, 8
          %1609 = vbcast.lane.b32.xlu0 %v1603, %s1608
          %v1610 = vpop.permute.xlu0 %1609
          %v1611 = vlaneseq
          %v1612 = vshrl.u32 %v1611, 7
          %v1613 = vsub.s32 5, %v1612
          %v1614 = vrot.slane %v1555, %v1613
          %1616 = vbcast.lane.b32.xlu0 %v1614, 256
          %v1617 = vpop.permute.xlu0 %1616
          %s1619 = sor.u32 256, 8
          %1620 = vbcast.lane.b32.xlu0 %v1614, %s1619
          %v1621 = vpop.permute.xlu0 %1620
          %v1622 = vlaneseq
          %v1623 = vshrl.u32 %v1622, 7
          %v1624 = vsub.s32 6, %v1623
          %v1625 = vrot.slane %v1555, %v1624
          %1627 = vbcast.lane.b32.xlu0 %v1625, 256
          %v1628 = vpop.permute.xlu0 %1627
          %s1630 = sor.u32 256, 8
          %1631 = vbcast.lane.b32.xlu0 %v1625, %s1630
          %v1632 = vpop.permute.xlu0 %1631
          %v1633 = vlaneseq
          %v1634 = vshrl.u32 %v1633, 7
          %v1635 = vsub.s32 7, %v1634
          %v1636 = vrot.slane %v1555, %v1635
          %1638 = vbcast.lane.b32.xlu0 %v1636, 256
          %v1639 = vpop.permute.xlu0 %1638
          %s1641 = sor.u32 256, 8
          %1642 = vbcast.lane.b32.xlu0 %v1636, %s1641
          %v1643 = vpop.permute.xlu0 %1642
          %v1644 = vmul.f32 %v1562, %v967
          %v1645 = vmul.f32 %v1566, %v968
          %v1646 = vmul.f32 %v1573, %v969
          %v1647 = vmul.f32 %v1577, %v970
          %v1648 = vmul.f32 %v1584, %v971
          %v1649 = vmul.f32 %v1588, %v972
          %v1650 = vmul.f32 %v1595, %v973
          %v1651 = vmul.f32 %v1599, %v974
          %v1652 = vmul.f32 %v1606, %v975
          %v1653 = vmul.f32 %v1610, %v976
          %v1654 = vmul.f32 %v1617, %v977
          %v1655 = vmul.f32 %v1621, %v978
          %v1656 = vmul.f32 %v1628, %v979
          %v1657 = vmul.f32 %v1632, %v980
          %v1658 = vmul.f32 %v1639, %v981
          %v1659 = vmul.f32 %v1643, %v982
          %v1660 = vadd.f32 %v1644, %v1645
          %v1661 = vrot.slane %v1660, 4
          %v1662 = vadd.f32 %v1660, %v1661
          %v1663 = vrot.slane %v1662, 2
          %v1664 = vadd.f32 %v1662, %v1663
          %v1665 = vrot.slane %v1664, 1
          %v1666 = vadd.f32 %v1664, %v1665
          %v1667 = vadd.f32 %v1646, %v1647
          %v1668 = vrot.slane %v1667, 4
          %v1669 = vadd.f32 %v1667, %v1668
          %v1670 = vrot.slane %v1669, 2
          %v1671 = vadd.f32 %v1669, %v1670
          %v1672 = vrot.slane %v1671, 1
          %v1673 = vadd.f32 %v1671, %v1672
          %v1674 = vadd.f32 %v1648, %v1649
          %v1675 = vrot.slane %v1674, 4
          %v1676 = vadd.f32 %v1674, %v1675
          %v1677 = vrot.slane %v1676, 2
          %v1678 = vadd.f32 %v1676, %v1677
          %v1679 = vrot.slane %v1678, 1
          %v1680 = vadd.f32 %v1678, %v1679
          %v1681 = vadd.f32 %v1650, %v1651
          %v1682 = vrot.slane %v1681, 4
          %v1683 = vadd.f32 %v1681, %v1682
          %v1684 = vrot.slane %v1683, 2
          %v1685 = vadd.f32 %v1683, %v1684
          %v1686 = vrot.slane %v1685, 1
          %v1687 = vadd.f32 %v1685, %v1686
          %v1688 = vadd.f32 %v1652, %v1653
          %v1689 = vrot.slane %v1688, 4
          %v1690 = vadd.f32 %v1688, %v1689
          %v1691 = vrot.slane %v1690, 2
          %v1692 = vadd.f32 %v1690, %v1691
          %v1693 = vrot.slane %v1692, 1
          %v1694 = vadd.f32 %v1692, %v1693
          %v1695 = vadd.f32 %v1654, %v1655
          %v1696 = vrot.slane %v1695, 4
          %v1697 = vadd.f32 %v1695, %v1696
          %v1698 = vrot.slane %v1697, 2
          %v1699 = vadd.f32 %v1697, %v1698
          %v1700 = vrot.slane %v1699, 1
          %v1701 = vadd.f32 %v1699, %v1700
          %v1702 = vadd.f32 %v1656, %v1657
          %v1703 = vrot.slane %v1702, 4
          %v1704 = vadd.f32 %v1702, %v1703
          %v1705 = vrot.slane %v1704, 2
          %v1706 = vadd.f32 %v1704, %v1705
          %v1707 = vrot.slane %v1706, 1
          %v1708 = vadd.f32 %v1706, %v1707
          %v1709 = vadd.f32 %v1658, %v1659
          %v1710 = vrot.slane %v1709, 4
          %v1711 = vadd.f32 %v1709, %v1710
          %v1712 = vrot.slane %v1711, 2
          %v1713 = vadd.f32 %v1711, %v1712
          %v1714 = vrot.slane %v1713, 1
          %v1715 = vadd.f32 %v1713, %v1714
          %v1717 = vlaneseq
          %v1718 = vshrl.u32 %v1717, 7
          %v1719 = vsub.s32 0, %v1718
          %v1720 = vrot.slane %v830, %v1719
          %v1722 = vmul.f32 %v1666, %v1720
          %v1723 = vmul.f32 %v1673, %v1720
          %v1724 = vmul.f32 %v1680, %v1720
          %v1725 = vmul.f32 %v1687, %v1720
          %v1726 = vmul.f32 %v1694, %v1720
          %v1727 = vmul.f32 %v1701, %v1720
          %v1728 = vmul.f32 %v1708, %v1720
          %v1729 = vmul.f32 %v1715, %v1720
          %v1738 = vrot.slane %v1723, 7
          %v1739 = vsel %vm1121, %v1738, %v1722
          %v1740 = vrot.slane %v1724, 6
          %v1741 = vsel %vm1123, %v1740, %v1739
          %v1742 = vrot.slane %v1725, 5
          %v1743 = vsel %vm1125, %v1742, %v1741
          %v1744 = vrot.slane %v1726, 4
          %v1745 = vsel %vm1127, %v1744, %v1743
          %v1746 = vrot.slane %v1727, 3
          %v1747 = vsel %vm1129, %v1746, %v1745
          %v1748 = vrot.slane %v1728, 2
          %v1749 = vsel %vm1131, %v1748, %v1747
          %v1750 = vrot.slane %v1729, 1
          %v1751 = vsel %vm1133, %v1750, %v1749
          %1753 = vadd.xlane.f32.xlu0 %v1751
          %v1754 = vpop.xlane.xlu0 %1753
          %v1755 = vadd.f32 %v1547, %v1754
          %v1756 = vmax.f32 %v831, %v835
          %v1757 = vmax.f32 %v832, %v836
          %v1758 = vmax.f32 %v833, %v837
          %v1759 = vmax.f32 %v834, %v838
          %v1760 = vmax.f32 %v1756, %v839
          %v1761 = vmax.f32 %v1757, %v840
          %v1762 = vmax.f32 %v1758, %v841
          %v1763 = vmax.f32 %v1759, %v842
          %v1764 = vmax.f32 %v1760, %v843
          %v1765 = vmax.f32 %v1761, %v844
          %v1766 = vmax.f32 %v1762, %v845
          %v1767 = vmax.f32 %v1763, %v846
          %v1768 = vmax.f32 %v1764, %v1765
          %v1769 = vmax.f32 %v1766, %v1767
          %v1770 = vmax.f32 %v1768, %v1769
          %v1771 = vrot.slane %v1770, 4
          %v1772 = vmax.f32 %v1770, %v1771
          %v1773 = vrot.slane %v1772, 2
          %v1774 = vmax.f32 %v1772, %v1773
          %v1775 = vrot.slane %v1774, 1
          %v1776 = vmax.f32 %v1774, %v1775
          %v1777 = vsub.f32 %v831, %v1776
          %v1778 = vsub.f32 %v832, %v1776
          %v1779 = vsub.f32 %v833, %v1776
          %v1780 = vsub.f32 %v834, %v1776
          %v1781 = vsub.f32 %v835, %v1776
          %v1782 = vsub.f32 %v836, %v1776
          %v1783 = vsub.f32 %v837, %v1776
          %v1784 = vsub.f32 %v838, %v1776
          %v1785 = vsub.f32 %v839, %v1776
          %v1786 = vsub.f32 %v840, %v1776
          %v1787 = vsub.f32 %v841, %v1776
          %v1788 = vsub.f32 %v842, %v1776
          %v1789 = vsub.f32 %v843, %v1776
          %v1790 = vsub.f32 %v844, %v1776
          %v1791 = vsub.f32 %v845, %v1776
          %v1792 = vsub.f32 %v846, %v1776
          %v1793 = vmul.f32 %v1777, 1.442695
          %v1794 = vpow.pop %v1793
          %v1795 = vmul.f32 %v1778, 1.442695
          %v1796 = vpow.pop %v1795
          %v1797 = vmul.f32 %v1779, 1.442695
          %v1798 = vpow.pop %v1797
          %v1799 = vmul.f32 %v1780, 1.442695
          %v1800 = vpow.pop %v1799
          %v1801 = vmul.f32 %v1781, 1.442695
          %v1802 = vpow.pop %v1801
          %v1803 = vmul.f32 %v1782, 1.442695
          %v1804 = vpow.pop %v1803
          %v1805 = vmul.f32 %v1783, 1.442695
          %v1806 = vpow.pop %v1805
          %v1807 = vmul.f32 %v1784, 1.442695
          %v1808 = vpow.pop %v1807
          %v1809 = vmul.f32 %v1785, 1.442695
          %v1810 = vpow.pop %v1809
          %v1811 = vmul.f32 %v1786, 1.442695
          %v1812 = vpow.pop %v1811
          %v1813 = vmul.f32 %v1787, 1.442695
          %v1814 = vpow.pop %v1813
          %v1815 = vmul.f32 %v1788, 1.442695
          %v1816 = vpow.pop %v1815
          %v1817 = vmul.f32 %v1789, 1.442695
          %v1818 = vpow.pop %v1817
          %v1819 = vmul.f32 %v1790, 1.442695
          %v1820 = vpow.pop %v1819
          %v1821 = vmul.f32 %v1791, 1.442695
          %v1822 = vpow.pop %v1821
          %v1823 = vmul.f32 %v1792, 1.442695
          %v1824 = vpow.pop %v1823
          %v1833 = vrot.slane %v813, 7
          %v1834 = vsel %vm1121, %v1833, %v811
          %v1835 = vrot.slane %v815, 6
          %v1836 = vsel %vm1123, %v1835, %v1834
          %v1837 = vrot.slane %v817, 5
          %v1838 = vsel %vm1125, %v1837, %v1836
          %v1839 = vrot.slane %v819, 4
          %v1840 = vsel %vm1127, %v1839, %v1838
          %v1841 = vrot.slane %v821, 3
          %v1842 = vsel %vm1129, %v1841, %v1840
          %v1843 = vrot.slane %v823, 2
          %v1844 = vsel %vm1131, %v1843, %v1842
          %v1845 = vrot.slane %v825, 1
          %v1846 = vsel %vm1133, %v1845, %v1844
          %v1848 = vadd.f32 %v1145, %v1846
          %s1849 = sld [smem:[#allocation4 + %s35]]
          // While loop
          $region149: #{tpu_custom_call.1} parent=147 // loop_pre_header
            _
          $region150: #{tpu_custom_call.1} parent=147 // loop_header
            %s1851 = sphi 1, %s1853
            %p1852 = scmp.ge.s32.totalorder %s1851, %s1849
            %v1856 = vphi %v1848, %v2079
          $region151: #{tpu_custom_call.1} parent=147 // loop_header_branch
            %1855 = sbr.rel (%p1852) target = $region155
          $region152: #{tpu_custom_call.1} parent=147 // loop_body
            %s1857 = scalar_lea.vmem [#allocation2], %s1851
            %v1858 = vld [vmem:[%s1857] sm:$0x1]
            %v1859 = vld [vmem:[%s1857 + $0x10] sm:$0x1]
            %v1860 = vld [vmem:[%s1857 + $0x20] sm:$0x1]
            %v1861 = vld [vmem:[%s1857 + $0x30] sm:$0x1]
            %v1862 = vld [vmem:[%s1857 + $0x40] sm:$0x1]
            %v1863 = vld [vmem:[%s1857 + $0x50] sm:$0x1]
            %v1864 = vld [vmem:[%s1857 + $0x60] sm:$0x1]
            %v1865 = vld [vmem:[%s1857 + $0x70] sm:$0x1]
            %1866 = vmax.xlane.f32.xlu0 %v1856
            %v1867 = vpop.xlane.xlu0 %1866
            %v1868 = vsub.f32 %v1856, %v1867
            %v1869 = vmul.f32 %v1868, 1.442695
            %v1870 = vpow.pop %v1869
            %1871 = vmatprep.subr.mxu0 0.0
            %1872 = vmatpush1.msra.mxu0 %v1824
            %1873 = vmatprep.subr.mxu0 0.0
            %1874 = vmatpush1.msra.mxu0 %v1822
            %1875 = vmatprep.subr.mxu0 0.0
            %1876 = vmatpush1.msra.mxu0 %v1820
            %1877 = vmatprep.subr.mxu0 0.0
            %1878 = vmatpush1.msra.mxu0 %v1818
            %1879 = vmatprep.subr.mxu0 0.0
            %1880 = vmatpush1.msra.mxu0 %v1816
            %1881 = vmatprep.subr.mxu0 0.0
            %1882 = vmatpush1.msra.mxu0 %v1814
            %1883 = vmatprep.subr.mxu0 0.0
            %1884 = vmatpush1.msra.mxu0 %v1812
            %1885 = vmatprep.subr.mxu0 0.0
            %1886 = vmatpush1.msra.mxu0 %v1810
            %1887 = vmatprep.subr.mxu0 0.0
            %1888 = vmatpush1.msra.mxu0 %v1808
            %1889 = vmatprep.subr.mxu0 0.0
            %1890 = vmatpush1.msra.mxu0 %v1806
            %1891 = vmatprep.subr.mxu0 0.0
            %1892 = vmatpush1.msra.mxu0 %v1804
            %1893 = vmatprep.subr.mxu0 0.0
            %1894 = vmatpush1.msra.mxu0 %v1802
            %1895 = vmatprep.subr.mxu0 0.0
            %1896 = vmatpush1.msra.mxu0 %v1800
            %1897 = vmatprep.subr.mxu0 0.0
            %1898 = vmatpush1.msra.mxu0 %v1798
            %1899 = vmatprep.subr.mxu0 0.0
            %1900 = vmatpush1.msra.mxu0 %v1796
            %1901 = vmatprep.subr.mxu0 0.0
            %1902 = vmatpush1.msra.mxu0 %v1794
            %1903 = vmatprep.subr.mxu0 0.0
            %1904 = vmatpush2.msra.mxu0 0.0
            %1905 = vmatprep.subr.mxu0 0.0
            %1906 = vmatpush2.msra.mxu0 0.0
            %1907 = vmatprep.subr.mxu0 0.0
            %1908 = vmatpush2.msra.mxu0 0.0
            %1909 = vmatprep.subr.mxu0 0.0
            %1910 = vmatpush2.msra.mxu0 0.0
            %1911 = vmatprep.subr.mxu0 0.0
            %1912 = vmatpush2.msra.mxu0 0.0
            %1913 = vmatprep.subr.mxu0 0.0
            %1914 = vmatpush2.msra.mxu0 0.0
            %1915 = vmatprep.subr.mxu0 0.0
            %1916 = vmatpush2.msra.mxu0 0.0
            %1917 = vmatprep.subr.mxu0 0.0
            %1918 = vmatpush2.msra.mxu0 0.0
            %1919 = vmatprep.subr.mxu0 0.0
            %1920 = vmatpush2.msra.mxu0 0.0
            %1921 = vmatprep.subr.mxu0 0.0
            %1922 = vmatpush2.msra.mxu0 0.0
            %1923 = vmatprep.subr.mxu0 0.0
            %1924 = vmatpush2.msra.mxu0 0.0
            %1925 = vmatprep.subr.mxu0 0.0
            %1926 = vmatpush2.msra.mxu0 0.0
            %1927 = vmatprep.subr.mxu0 0.0
            %1928 = vmatpush2.msra.mxu0 0.0
            %1929 = vmatprep.subr.mxu0 0.0
            %1930 = vmatpush2.msra.mxu0 0.0
            %1931 = vmatprep.subr.mxu0 0.0
            %1932 = vmatpush2.msra.mxu0 0.0
            %1933 = vmatprep.subr.mxu0 0.0
            %1934 = vmatpush2.msra.mxu0 0.0
            %1935 = vmatprep.mubr.f32.mxu0 0.0
            %1936 = vmatmul.mubr.f32.gmra.mxu0 %v1870
            %v1937 = vpop.f32.mrf.mxu0
            %v1938 = vadd.f32 0.0, %v1937
            %v1939 = vpop.f32.mrf.mxu0
            %1940 = vdwg.mxu0
            %v1941 = vadd.f32 %v1867, %v1776
            %v1942 = vmax.f32 %v1938, 1e-30
            %v1943 = vlog2.pop %v1942
            %v1944 = vmul.f32 %v1943, 0.6931472
            %v1945 = vadd.f32 %v1941, %v1944
            %v1954 = vrot.slane %v1859, 7
            %v1955 = vsel %vm1121, %v1954, %v1858
            %v1956 = vrot.slane %v1860, 6
            %v1957 = vsel %vm1123, %v1956, %v1955
            %v1958 = vrot.slane %v1861, 5
            %v1959 = vsel %vm1125, %v1958, %v1957
            %v1960 = vrot.slane %v1862, 4
            %v1961 = vsel %vm1127, %v1960, %v1959
            %v1962 = vrot.slane %v1863, 3
            %v1963 = vsel %vm1129, %v1962, %v1961
            %v1964 = vrot.slane %v1864, 2
            %v1965 = vsel %vm1131, %v1964, %v1963
            %v1966 = vrot.slane %v1865, 1
            %v1967 = vsel %vm1133, %v1966, %v1965
            %v1969 = vadd.f32 %v1945, %v1967
            %vm1970 = vcmp.gt.f32.partialorder %v1858, 0.0
            %vm1971 = vcmp.gt.f32.partialorder %v1859, 0.0
            %vm1972 = vcmp.gt.f32.partialorder %v1860, 0.0
            %vm1973 = vcmp.gt.f32.partialorder %v1861, 0.0
            %vm1974 = vcmp.gt.f32.partialorder %v1862, 0.0
            %vm1975 = vcmp.gt.f32.partialorder %v1863, 0.0
            %vm1976 = vcmp.gt.f32.partialorder %v1864, 0.0
            %vm1977 = vcmp.gt.f32.partialorder %v1865, 0.0
            %v1978 = vsel %vm1970, 1, 0
            %v1979 = vsel %vm1971, 1, 0
            %v1980 = vsel %vm1972, 1, 0
            %v1981 = vsel %vm1973, 1, 0
            %v1982 = vsel %vm1974, 1, 0
            %v1983 = vsel %vm1975, 1, 0
            %v1984 = vsel %vm1976, 1, 0
            %v1985 = vsel %vm1977, 1, 0
            %1986 = vset.pattern.permute.xlu0 127
            %1987 = vperm.xlu0 %1986, %v1978
            %v1988 = vpop.permute.xlu0 %1987
            %1989 = vset.pattern.permute.xlu0 127
            %1990 = vperm.xlu0 %1989, %v1979
            %v1991 = vpop.permute.xlu0 %1990
            %1992 = vset.pattern.permute.xlu0 127
            %1993 = vperm.xlu0 %1992, %v1980
            %v1994 = vpop.permute.xlu0 %1993
            %1995 = vset.pattern.permute.xlu0 127
            %1996 = vperm.xlu0 %1995, %v1981
            %v1997 = vpop.permute.xlu0 %1996
            %1998 = vset.pattern.permute.xlu0 127
            %1999 = vperm.xlu0 %1998, %v1982
            %v2000 = vpop.permute.xlu0 %1999
            %2001 = vset.pattern.permute.xlu0 127
            %2002 = vperm.xlu0 %2001, %v1983
            %v2003 = vpop.permute.xlu0 %2002
            %2004 = vset.pattern.permute.xlu0 127
            %2005 = vperm.xlu0 %2004, %v1984
            %v2006 = vpop.permute.xlu0 %2005
            %2007 = vset.pattern.permute.xlu0 127
            %2008 = vperm.xlu0 %2007, %v1985
            %v2009 = vpop.permute.xlu0 %2008
            %vm2010 = vcmp.eq.s32.totalorder %v1988, 1
            %vm2011 = vcmp.eq.s32.totalorder %v1991, 1
            %vm2012 = vcmp.eq.s32.totalorder %v1994, 1
            %vm2013 = vcmp.eq.s32.totalorder %v1997, 1
            %vm2014 = vcmp.eq.s32.totalorder %v2000, 1
            %vm2015 = vcmp.eq.s32.totalorder %v2003, 1
            %vm2016 = vcmp.eq.s32.totalorder %v2006, 1
            %vm2017 = vcmp.eq.s32.totalorder %v2009, 1
            %v2019 = vrot.slane %v1969, 1
            %v2020 = vrot.slane %v1969, 2
            %v2021 = vrot.slane %v1969, 3
            %v2022 = vrot.slane %v1969, 4
            %v2023 = vrot.slane %v1969, 5
            %v2024 = vrot.slane %v1969, 6
            %v2025 = vrot.slane %v1969, 7
            %v2035 = vrot.slane %v1856, 1
            %v2036 = vrot.slane %v1856, 2
            %v2037 = vrot.slane %v1856, 3
            %v2038 = vrot.slane %v1856, 4
            %v2039 = vrot.slane %v1856, 5
            %v2040 = vrot.slane %v1856, 6
            %v2041 = vrot.slane %v1856, 7
            %v2050 = vsel %vm2010, %v1969, %v1856
            %v2051 = vsel %vm2011, %v2019, %v2035
            %v2052 = vsel %vm2012, %v2020, %v2036
            %v2053 = vsel %vm2013, %v2021, %v2037
            %v2054 = vsel %vm2014, %v2022, %v2038
            %v2055 = vsel %vm2015, %v2023, %v2039
            %v2056 = vsel %vm2016, %v2024, %v2040
            %v2057 = vsel %vm2017, %v2025, %v2041
            %v2066 = vrot.slane %v2051, 7
            %v2067 = vsel %vm1121, %v2066, %v2050
            %v2068 = vrot.slane %v2052, 6
            %v2069 = vsel %vm1123, %v2068, %v2067
            %v2070 = vrot.slane %v2053, 5
            %v2071 = vsel %vm1125, %v2070, %v2069
            %v2072 = vrot.slane %v2054, 4
            %v2073 = vsel %vm1127, %v2072, %v2071
            %v2074 = vrot.slane %v2055, 3
            %v2075 = vsel %vm1129, %v2074, %v2073
            %v2076 = vrot.slane %v2056, 2
            %v2077 = vsel %vm1131, %v2076, %v2075
            %v2078 = vrot.slane %v2057, 1
            %v2079 = vsel %vm1133, %v2078, %v2077
          $region153: #{tpu_custom_call.1} parent=147 // loop_footer
            %s1853 = sadd.s32 %s1851, 1
          $region154: #{tpu_custom_call.1} parent=147 // loop_footer_branch
            %1850 = sbr.rel target = $region150
          $region155: #{tpu_custom_call.1} parent=147 // loop_exit
            _
          %v2081 = vadd.f32 %v1856, %v1720
          %2082 = vmax.xlane.f32.xlu0 %v2081
          %v2083 = vpop.xlane.xlu0 %2082
          %v2084 = vsub.f32 %v2081, %v2083
          %v2085 = vmul.f32 %v2084, 1.442695
          %v2086 = vpow.pop %v2085
          %2087 = vadd.xlane.f32.xlu0 %v2086
          %v2088 = vpop.xlane.xlu0 %2087
          %v2089 = vlog2.pop %v2088
          %v2090 = vmul.f32 %v2089, 0.6931472
          %v2091 = vadd.f32 %v2083, %v2090
          %v2092 = vsub.f32 %v1755, %v2091
          %v2093 = vrot.slane %v2092, 4
          %v2094 = vadd.f32 %v2092, %v2093
          %v2095 = vrot.slane %v2094, 2
          %v2096 = vadd.f32 %v2094, %v2095
          %v2097 = vrot.slane %v2096, 1
          %v2098 = vadd.f32 %v2096, %v2097
          %vm2099 = vcmask 0
          %2100 = vst.msk [vmem:[%s588] sm:$0x1] %vm2099, %v2098
        $region148: #{tpu_custom_call.1} parent=123 // pred_fallthru
          _
        %p2101 = scmp.lt.s32.totalorder %s35, 1
        %s2102 = scalar_select %p2101, %s35, 1
        %s2103 = scalar_lea.vmem %s10, %s2102
        // Predicated region
        $region156: #{tpu_custom_call.1} parent=123 // pred_check
          %p2104 = pneg %p274
        $region157: #{tpu_custom_call.1} parent=123 // pred_check_branch
          %2106 = sbr.rel (%p2104) target = $region159
        $region158: #{tpu_custom_call.1} parent=123 // pred_region
          _
        $region159: #{tpu_custom_call.1} parent=123 // pred_fallthru
          _
      $region124: #{tpu_custom_call.1} parent=5 // pred_fallthru
        _
      %p2107 = scmp.le.s32.totalorder 2, %s26
      // Predicated region
      $region160: #{tpu_custom_call.1} parent=5 // pred_check
        %p2108 = pneg %p2107
      $region161: #{tpu_custom_call.1} parent=5 // pred_check_branch
        %2110 = sbr.rel (%p2108) target = $region163
      $region162: #{tpu_custom_call.1} parent=5 // pred_region
        %s2111 = ssub.s32 %s26, 2
        // Predicated region
        $region164: #{tpu_custom_call.1} parent=162 // pred_check
          %p2112 = pneg %p280
        $region165: #{tpu_custom_call.1} parent=162 // pred_check_branch
          %2114 = sbr.rel (%p2112) target = $region167
        $region166: #{tpu_custom_call.1} parent=162 // pred_region
          %p2115 = scmp.lt.s32.totalorder %s37, 1
          %s2116 = scalar_select %p2115, %s37, 1
          %s2117 = scalar_lea.vmem %s10, %s2116
        $region167: #{tpu_custom_call.1} parent=162 // pred_fallthru
          _
      $region163: #{tpu_custom_call.1} parent=5 // pred_fallthru
        _
    $region6: #{tpu_custom_call.1} parent=1 // loop_footer
      %s30 = sadd.s32 1, %s26
    $region7: #{tpu_custom_call.1} parent=1 // loop_footer_branch
      %25 = sbr.rel target = $region3
    $region8: #{tpu_custom_call.1} parent=1 // loop_exit
      _
    %2118 = vsyncpa [#allocation7], 1
    %s2119 = scalar_lea.sflag [#allocation7], 1
    %2120 = vsyncpa %s2119, 1
    %2121 = vsyncpa [#allocation10], 1
    %s2122 = scalar_lea.sflag [#allocation10], 1
    %2123 = vsyncpa %s2122, 1

</llo_original>
